<compile_context>
chip_gen: v7x
topology: tpu7x:2x2x1
jax: 0.10.0
libtpu: 0.0.40
codegen_flags: <defaults>
</compile_context>

<pallas_src>
import jax
import jax.numpy as jnp
from jax.experimental import pallas as pl
from jax.experimental.pallas import tpu as pltpu


def basern_kernel(xa_ref, code_ref,
                  wg1_xc, wg1_q, bg1, wg2, bg2, wg3, bg3,
                  wf1, bf1, wf2, bf2, wf3, bf3,
                  out_ref):
    # xa_ref  : (TB*O, C+2) bf16  image features + coord channels, pre-flattened
    # code_ref: (TB, HD)    bf16  question code
    tbo = xa_ref.shape[0]
    tb = code_ref.shape[0]
    o = tbo // tb
    gt = wg1_xc.shape[1]

    # --- g_theta layer 1, decomposed ---------------------------------------
    # image+coord rows: one (TB*O, C+2) x (C+2, GT) MXU matmul.
    hx = jnp.dot(xa_ref[...], wg1_xc[...], preferred_element_type=jnp.float32)
    # question rows: tiny (TB, HD) x (HD, GT) matmul, broadcast over objects
    # on-chip instead of materializing the question-broadcast pairs in HBM.
    hq = jnp.dot(code_ref[...], wg1_q[...],
                 preferred_element_type=jnp.float32) + bg1[...]
    h = hx.reshape(tb, o, gt) + hq[:, None, :]
    # bias add in f32, downcast, ReLU in bf16 (identical to max-then-cast).
    h = jnp.maximum(h.astype(jnp.bfloat16), 0).reshape(tbo, gt)

    # --- g_theta layers 2-3 --------------------------------------------------
    h = jnp.dot(h, wg2[...], preferred_element_type=jnp.float32) + bg2[...]
    h = jnp.maximum(h.astype(jnp.bfloat16), 0)
    h = jnp.dot(h, wg3[...], preferred_element_type=jnp.float32) + bg3[...]
    h = jnp.maximum(h, 0.0)                                   # f32 (TB*O, GT)

    # --- .sum(1): reduce over the object axis (O % 8 == 0 -> clean reshape) --
    r = jnp.sum(h.reshape(tb, o, gt), axis=1).astype(jnp.bfloat16)   # (TB, GT)

    # --- f_phi MLP (last layer linear) ---------------------------------------
    f = jnp.dot(r, wf1[...], preferred_element_type=jnp.float32) + bf1[...]
    f = jnp.maximum(f.astype(jnp.bfloat16), 0)
    f = jnp.dot(f, wf2[...], preferred_element_type=jnp.float32) + bf2[...]
    f = jnp.maximum(f.astype(jnp.bfloat16), 0)
    logits = jnp.dot(f, wf3[...], preferred_element_type=jnp.float32) + bf3[...]

    out_ref[...] = logits.astype(out_ref.dtype)               # (TB, A_pad)


def encode_visual_flat(x):
    # (N, C, H, W) -> (N*H*W, C+2) bf16: channels-last + coord channels, built
    # in one XLA producer so only this compact slab hits HBM (no question
    # broadcast, no f32 pairs tensor).
    n, c, h, w = x.shape
    img = jnp.transpose(x, (0, 2, 3, 1))
    xc = jnp.broadcast_to(
        jnp.linspace(-h / 2, h / 2, h).reshape(1, h, 1, 1), (n, h, w, 1))
    yc = jnp.broadcast_to(
        jnp.linspace(-w / 2, w / 2, w).reshape(1, 1, w, 1), (n, h, w, 1))
    cat = jnp.concatenate([img, xc, yc], axis=-1).astype(jnp.bfloat16)
    return cat.reshape(n * h * w, c + 2)


def baseline_encode_ref(images, questions):
    # Literal f32 port of the PyTorch baseline_encode (reference check only).
    n, c, h, w = images.shape
    hd = questions.shape[1]
    img = jnp.transpose(images, (0, 2, 3, 1))
    xc = jnp.broadcast_to(
        jnp.linspace(-h / 2, h / 2, h).reshape(1, h, 1, 1), (n, h, w, 1))
    yc = jnp.broadcast_to(
        jnp.linspace(-w / 2, w / 2, w).reshape(1, 1, w, 1), (n, h, w, 1))
    q = jnp.broadcast_to(questions[:, None, None, :], (n, h, w, hd))
    cat = jnp.concatenate([img, xc, yc, q], axis=-1)
    return cat.reshape(n, h * w, c + 2 + hd)


def prepare_basern_params(params, cv_filter):
    """One-time parameter prep (outside the per-call path): bf16 MXU weights,
    wg1 split for the decomposed first matmul, final layer lane-padded to 128."""
    (wg1, bg1, wg2, bg2, wg3, bg3, wf1, bf1, wf2, bf2, wf3, bf3) = params
    a_size = wf3.shape[1]
    fp = wf3.shape[0]
    a_pad = ((a_size + 127) // 128) * 128
    wf3p = jnp.zeros((fp, a_pad), jnp.float32).at[:, :a_size].set(wf3)
    bf3p = jnp.zeros((1, a_pad), jnp.float32).at[:, :a_size].set(bf3)
    b16 = lambda a: a.astype(jnp.bfloat16)
    weights = (b16(wg1[:cv_filter + 2]),   # image + coord rows of wg1
               b16(wg1[cv_filter + 2:]),   # question rows of wg1
               bg1, b16(wg2), bg2, b16(wg3), bg3,
               b16(wf1), bf1, b16(wf2), bf2, b16(wf3p), bf3p)
    return weights, a_size, a_pad


def pick_batch_tile(n, block_b):
    # Largest multiple-of-8 batch tile <= block_b, preferring >= 2 grid steps
    # so both v7x TensorCores get work under dimension_semantics=("parallel",).
    tb = max(8, min((block_b // 8) * 8, ((n + 7) // 8) * 8))
    while tb > 8 and (n + tb - 1) // tb < 2:
        tb -= 8
    return tb


def basern_forward(x, code, prepared, *, block_b=64):
    weights, a_size, a_pad = prepared
    n, c, h, w = x.shape
    o = h * w
    hd = code.shape[1]

    tb = pick_batch_tile(n, block_b)
    n_pad = ((n + tb - 1) // tb) * tb
    if n_pad != n:
        # Pad the (small) inputs first so the bf16 encode producer emits the
        # padded slab directly.
        x = jnp.pad(x, ((0, n_pad - n), (0, 0), (0, 0), (0, 0)))
        code = jnp.pad(code, ((0, n_pad - n), (0, 0)))

    xa = encode_visual_flat(x)              # (n_pad*o, c+2) bf16
    code_bf = code.astype(jnp.bfloat16)     # (n_pad, hd)   bf16

    gt = weights[0].shape[1]
    fp = weights[7].shape[1]
    flops = (2 * n_pad * o * ((c + 2) * gt + 2 * gt * gt)     # g_theta (x path)
             + 2 * n_pad * hd * gt                            # g_theta (q path)
             + n_pad * o * gt                                 # object sum
             + 2 * n_pad * (gt * fp + fp * fp + fp * a_pad))  # f_phi
    bytes_accessed = (int(xa.size) * 2 + int(code_bf.size) * 2
                      + sum(int(a.size) * a.dtype.itemsize for a in weights)
                      + n_pad * a_pad * 4)

    full = lambda arr: pl.BlockSpec(arr.shape, lambda b: (0,) * arr.ndim)
    # NOTE: for v7x at large TB / hidden sizes, set vmem_limit_bytes explicitly
    # and re-derive TB (64 MiB VMEM vs 128 MiB on v5e/v6e); not needed here.

    out = pl.pallas_call(
        basern_kernel,
        out_shape=jax.ShapeDtypeStruct((n_pad, a_pad), jnp.float32),
        grid_spec=pltpu.PrefetchScalarGridSpec(
            num_scalar_prefetch=0,
            grid=(n_pad // tb,),
            in_specs=[pl.BlockSpec((tb * o, c + 2), lambda b: (b, 0)),
                      pl.BlockSpec((tb, hd), lambda b: (b, 0))]
                     + [full(a) for a in weights],
            out_specs=pl.BlockSpec((tb, a_pad), lambda b: (b, 0)),
        ),
        compiler_params=pltpu.CompilerParams(
            dimension_semantics=("parallel",)),
        cost_estimate=pl.CostEstimate(flops=int(flops), transcendentals=0,
                                      bytes_accessed=int(bytes_accessed)),
    )(xa, code_bf, *weights)

    return out[:n, :a_size]


def init_params(key, d_in, gt_hidden, fp_hidden, a_size):
    ks = jax.random.split(key, 6)

    def lin(k, fan_in, fan_out):
        kw, kb = jax.random.split(k)
        scale = 1.0 / jnp.sqrt(fan_in)
        w = jax.random.uniform(kw, (fan_in, fan_out), jnp.float32, -scale, scale)
        b = jax.random.uniform(kb, (1, fan_out), jnp.float32, -scale, scale)
        return w, b

    wg1, bg1 = lin(ks[0], d_in, gt_hidden)
    wg2, bg2 = lin(ks[1], gt_hidden, gt_hidden)
    wg3, bg3 = lin(ks[2], gt_hidden, gt_hidden)
    wf1, bf1 = lin(ks[3], gt_hidden, fp_hidden)
    wf2, bf2 = lin(ks[4], fp_hidden, fp_hidden)
    wf3, bf3 = lin(ks[5], fp_hidden, a_size)
    return (wg1, bg1, wg2, bg2, wg3, bg3, wf1, bf1, wf2, bf2, wf3, bf3)


if __name__ == "__main__":
    # small synthetic config (N=16 -> 2 grid steps after batch-tile clamping)
    N, CV_FILTER, H, W = 16, 24, 8, 8
    TE_HIDDEN = 6
    GT_HIDDEN = 32
    FP_HIDDEN = 32
    A_SIZE = 16
    D_IN = CV_FILTER + 2 + TE_HIDDEN  # 32

    key = jax.random.PRNGKey(0)
    kx, kq, kp = jax.random.split(key, 3)
    x = jax.random.normal(kx, (N, CV_FILTER, H, W), jnp.float32)   # visual features
    code = jax.random.normal(kq, (N, TE_HIDDEN), jnp.float32)      # question code
    params = init_params(kp, D_IN, GT_HIDDEN, FP_HIDDEN, A_SIZE)

    prepared = prepare_basern_params(params, CV_FILTER)
    logits = basern_forward(x, code, prepared, block_b=64)
    jax.block_until_ready(logits)
    assert logits.shape == (N, A_SIZE)

    # pure-JAX reference: full-concat pairs with the same bf16-operand /
    # f32-accumulation recipe.  The kernel decomposes the first matmul, so the
    # accumulation split differs slightly -> tolerance check, not bit-exact.
    (wg1, bg1, wg2, bg2, wg3, bg3, wf1, bf1, wf2, bf2, wf3, bf3) = params
    b16 = lambda a: a.astype(jnp.bfloat16)
    pairs = b16(baseline_encode_ref(x, code))
    hh = jnp.maximum(jnp.einsum('nod,dg->nog', pairs, b16(wg1),
                                preferred_element_type=jnp.float32) + bg1, 0.0)
    hh = jnp.maximum(jnp.einsum('nod,dg->nog', b16(hh), b16(wg2),
                                preferred_element_type=jnp.float32) + bg2, 0.0)
    hh = jnp.maximum(jnp.einsum('nod,dg->nog', b16(hh), b16(wg3),
                                preferred_element_type=jnp.float32) + bg3, 0.0)
    r = b16(hh.sum(axis=1))
    f = jnp.maximum(jnp.dot(r, b16(wf1),
                            preferred_element_type=jnp.float32) + bf1, 0.0)
    f = jnp.maximum(jnp.dot(b16(f), b16(wf2),
                            preferred_element_type=jnp.float32) + bf2, 0.0)
    ref = jnp.dot(b16(f), b16(wf3), preferred_element_type=jnp.float32) + bf3
    assert jnp.allclose(logits, ref, atol=5e-2, rtol=1e-2), (
        float(jnp.max(jnp.abs(logits - ref))))

    print("KERNEL_OK")
</pallas_src>

<mosaic_0001>
module attributes {stable_mosaic.version = 11 : i64} {
  func.func @basern_kernel(%arg0: i32, %arg1: memref<512x26xbf16, #tpu.memory_space<vmem>>, %arg2: memref<8x6xbf16, #tpu.memory_space<vmem>>, %arg3: memref<26x32xbf16, #tpu.memory_space<vmem>>, %arg4: memref<6x32xbf16, #tpu.memory_space<vmem>>, %arg5: memref<1x32xf32, #tpu.memory_space<vmem>>, %arg6: memref<32x32xbf16, #tpu.memory_space<vmem>>, %arg7: memref<1x32xf32, #tpu.memory_space<vmem>>, %arg8: memref<32x32xbf16, #tpu.memory_space<vmem>>, %arg9: memref<1x32xf32, #tpu.memory_space<vmem>>, %arg10: memref<32x32xbf16, #tpu.memory_space<vmem>>, %arg11: memref<1x32xf32, #tpu.memory_space<vmem>>, %arg12: memref<32x32xbf16, #tpu.memory_space<vmem>>, %arg13: memref<1x32xf32, #tpu.memory_space<vmem>>, %arg14: memref<32x128xbf16, #tpu.memory_space<vmem>>, %arg15: memref<1x128xf32, #tpu.memory_space<vmem>>, %arg16: memref<8x128xf32, #tpu.memory_space<vmem>>) attributes {dimension_semantics = [#tpu.dimension_semantics<parallel>], iteration_bounds = array<i64: 2>, scalar_prefetch = 0 : i64, scratch_operands = 0 : i64, tpu.core_type = #tpu.core_type<tc>, window_params = [{transform_indices = @transform_0, window_bounds = array<i64: 512, 26>}, {transform_indices = @transform_1, window_bounds = array<i64: 8, 6>}, {pipeline_mode = #tpu.pipeline_mode<synchronous>, transform_indices = @transform_2, window_bounds = array<i64: 26, 32>}, {pipeline_mode = #tpu.pipeline_mode<synchronous>, transform_indices = @transform_3, window_bounds = array<i64: 6, 32>}, {pipeline_mode = #tpu.pipeline_mode<synchronous>, transform_indices = @transform_4, window_bounds = array<i64: 1, 32>}, {pipeline_mode = #tpu.pipeline_mode<synchronous>, transform_indices = @transform_5, window_bounds = array<i64: 32, 32>}, {pipeline_mode = #tpu.pipeline_mode<synchronous>, transform_indices = @transform_6, window_bounds = array<i64: 1, 32>}, {pipeline_mode = #tpu.pipeline_mode<synchronous>, transform_indices = @transform_7, window_bounds = array<i64: 32, 32>}, {pipeline_mode = #tpu.pipeline_mode<synchronous>, transform_indices = @transform_8, window_bounds = array<i64: 1, 32>}, {pipeline_mode = #tpu.pipeline_mode<synchronous>, transform_indices = @transform_9, window_bounds = array<i64: 32, 32>}, {pipeline_mode = #tpu.pipeline_mode<synchronous>, transform_indices = @transform_10, window_bounds = array<i64: 1, 32>}, {pipeline_mode = #tpu.pipeline_mode<synchronous>, transform_indices = @transform_11, window_bounds = array<i64: 32, 32>}, {pipeline_mode = #tpu.pipeline_mode<synchronous>, transform_indices = @transform_12, window_bounds = array<i64: 1, 32>}, {pipeline_mode = #tpu.pipeline_mode<synchronous>, transform_indices = @transform_13, window_bounds = array<i64: 32, 128>}, {pipeline_mode = #tpu.pipeline_mode<synchronous>, transform_indices = @transform_14, window_bounds = array<i64: 1, 128>}, {transform_indices = @transform_15, window_bounds = array<i64: 8, 128>}]} {
    %c0 = arith.constant 0 : index
    %c0_0 = arith.constant 0 : index
    %0 = vector.load %arg1[%c0, %c0_0] : memref<512x26xbf16, #tpu.memory_space<vmem>>, vector<512x26xbf16>
    %c0_1 = arith.constant 0 : index
    %c0_2 = arith.constant 0 : index
    %1 = vector.load %arg3[%c0_1, %c0_2] : memref<26x32xbf16, #tpu.memory_space<vmem>>, vector<26x32xbf16>
    %cst = arith.constant dense<0.000000e+00> : vector<512x32xf32>
    %2 = tpu.matmul %0, %1, %cst {dimension_numbers = #tpu.dot_dimension_numbers<[1], [0], [0], [1], [0, 0, 1, 1], [], []>} : vector<512x26xbf16>, vector<26x32xbf16>, vector<512x32xf32> -> vector<512x32xf32>
    %c0_3 = arith.constant 0 : index
    %c0_4 = arith.constant 0 : index
    %3 = vector.load %arg2[%c0_3, %c0_4] : memref<8x6xbf16, #tpu.memory_space<vmem>>, vector<8x6xbf16>
    %c0_5 = arith.constant 0 : index
    %c0_6 = arith.constant 0 : index
    %4 = vector.load %arg4[%c0_5, %c0_6] : memref<6x32xbf16, #tpu.memory_space<vmem>>, vector<6x32xbf16>
    %cst_7 = arith.constant dense<0.000000e+00> : vector<8x32xf32>
    %5 = tpu.matmul %3, %4, %cst_7 {dimension_numbers = #tpu.dot_dimension_numbers<[1], [0], [0], [1], [0, 0, 1, 1], [], []>} : vector<8x6xbf16>, vector<6x32xbf16>, vector<8x32xf32> -> vector<8x32xf32>
    %c0_8 = arith.constant 0 : index
    %c0_9 = arith.constant 0 : index
    %6 = vector.load %arg5[%c0_8, %c0_9] : memref<1x32xf32, #tpu.memory_space<vmem>>, vector<1x32xf32>
    %7 = vector.broadcast %6 : vector<1x32xf32> to vector<8x32xf32>
    %8 = arith.addf %5, %7 : vector<8x32xf32>
    %9 = vector.shape_cast %2 : vector<512x32xf32> to vector<8x64x32xf32>
    %10 = vector.shape_cast %8 : vector<8x32xf32> to vector<8x1x32xf32>
    %11 = vector.broadcast %10 : vector<8x1x32xf32> to vector<8x64x32xf32>
    %12 = arith.addf %9, %11 : vector<8x64x32xf32>
    %13 = arith.truncf %12 : vector<8x64x32xf32> to vector<8x64x32xbf16>
    %cst_10 = arith.constant 0.000000e+00 : bf16
    %14 = vector.broadcast %cst_10 : bf16 to vector<8x64x32xbf16>
    %15 = arith.maximumf %13, %14 : vector<8x64x32xbf16>
    %16 = vector.shape_cast %15 : vector<8x64x32xbf16> to vector<512x32xbf16>
    %c0_11 = arith.constant 0 : index
    %c0_12 = arith.constant 0 : index
    %17 = vector.load %arg6[%c0_11, %c0_12] : memref<32x32xbf16, #tpu.memory_space<vmem>>, vector<32x32xbf16>
    %cst_13 = arith.constant dense<0.000000e+00> : vector<512x32xf32>
    %18 = tpu.matmul %16, %17, %cst_13 {dimension_numbers = #tpu.dot_dimension_numbers<[1], [0], [0], [1], [0, 0, 1, 1], [], []>} : vector<512x32xbf16>, vector<32x32xbf16>, vector<512x32xf32> -> vector<512x32xf32>
    %c0_14 = arith.constant 0 : index
    %c0_15 = arith.constant 0 : index
    %19 = vector.load %arg7[%c0_14, %c0_15] : memref<1x32xf32, #tpu.memory_space<vmem>>, vector<1x32xf32>
    %20 = vector.broadcast %19 : vector<1x32xf32> to vector<512x32xf32>
    %21 = arith.addf %18, %20 : vector<512x32xf32>
    %22 = arith.truncf %21 : vector<512x32xf32> to vector<512x32xbf16>
    %cst_16 = arith.constant 0.000000e+00 : bf16
    %23 = vector.broadcast %cst_16 : bf16 to vector<512x32xbf16>
    %24 = arith.maximumf %22, %23 : vector<512x32xbf16>
    %c0_17 = arith.constant 0 : index
    %c0_18 = arith.constant 0 : index
    %25 = vector.load %arg8[%c0_17, %c0_18] : memref<32x32xbf16, #tpu.memory_space<vmem>>, vector<32x32xbf16>
    %cst_19 = arith.constant dense<0.000000e+00> : vector<512x32xf32>
    %26 = tpu.matmul %24, %25, %cst_19 {dimension_numbers = #tpu.dot_dimension_numbers<[1], [0], [0], [1], [0, 0, 1, 1], [], []>} : vector<512x32xbf16>, vector<32x32xbf16>, vector<512x32xf32> -> vector<512x32xf32>
    %c0_20 = arith.constant 0 : index
    %c0_21 = arith.constant 0 : index
    %27 = vector.load %arg9[%c0_20, %c0_21] : memref<1x32xf32, #tpu.memory_space<vmem>>, vector<1x32xf32>
    %28 = vector.broadcast %27 : vector<1x32xf32> to vector<512x32xf32>
    %29 = arith.addf %26, %28 : vector<512x32xf32>
    %cst_22 = arith.constant 0.000000e+00 : f32
    %30 = vector.broadcast %cst_22 : f32 to vector<512x32xf32>
    %31 = arith.maximumf %29, %30 : vector<512x32xf32>
    %32 = vector.shape_cast %31 : vector<512x32xf32> to vector<8x64x32xf32>
    %cst_23 = arith.constant dense<0.000000e+00> : vector<8x32xf32>
    %33 = vector.multi_reduction <add>, %32, %cst_23 [1] : vector<8x64x32xf32> to vector<8x32xf32>
    %34 = arith.truncf %33 : vector<8x32xf32> to vector<8x32xbf16>
    %c0_24 = arith.constant 0 : index
    %c0_25 = arith.constant 0 : index
    %35 = vector.load %arg10[%c0_24, %c0_25] : memref<32x32xbf16, #tpu.memory_space<vmem>>, vector<32x32xbf16>
    %cst_26 = arith.constant dense<0.000000e+00> : vector<8x32xf32>
    %36 = tpu.matmul %34, %35, %cst_26 {dimension_numbers = #tpu.dot_dimension_numbers<[1], [0], [0], [1], [0, 0, 1, 1], [], []>} : vector<8x32xbf16>, vector<32x32xbf16>, vector<8x32xf32> -> vector<8x32xf32>
    %c0_27 = arith.constant 0 : index
    %c0_28 = arith.constant 0 : index
    %37 = vector.load %arg11[%c0_27, %c0_28] : memref<1x32xf32, #tpu.memory_space<vmem>>, vector<1x32xf32>
    %38 = vector.broadcast %37 : vector<1x32xf32> to vector<8x32xf32>
    %39 = arith.addf %36, %38 : vector<8x32xf32>
    %40 = arith.truncf %39 : vector<8x32xf32> to vector<8x32xbf16>
    %cst_29 = arith.constant 0.000000e+00 : bf16
    %41 = vector.broadcast %cst_29 : bf16 to vector<8x32xbf16>
    %42 = arith.maximumf %40, %41 : vector<8x32xbf16>
    %c0_30 = arith.constant 0 : index
    %c0_31 = arith.constant 0 : index
    %43 = vector.load %arg12[%c0_30, %c0_31] : memref<32x32xbf16, #tpu.memory_space<vmem>>, vector<32x32xbf16>
    %cst_32 = arith.constant dense<0.000000e+00> : vector<8x32xf32>
    %44 = tpu.matmul %42, %43, %cst_32 {dimension_numbers = #tpu.dot_dimension_numbers<[1], [0], [0], [1], [0, 0, 1, 1], [], []>} : vector<8x32xbf16>, vector<32x32xbf16>, vector<8x32xf32> -> vector<8x32xf32>
    %c0_33 = arith.constant 0 : index
    %c0_34 = arith.constant 0 : index
    %45 = vector.load %arg13[%c0_33, %c0_34] : memref<1x32xf32, #tpu.memory_space<vmem>>, vector<1x32xf32>
    %46 = vector.broadcast %45 : vector<1x32xf32> to vector<8x32xf32>
    %47 = arith.addf %44, %46 : vector<8x32xf32>
    %48 = arith.truncf %47 : vector<8x32xf32> to vector<8x32xbf16>
    %cst_35 = arith.constant 0.000000e+00 : bf16
    %49 = vector.broadcast %cst_35 : bf16 to vector<8x32xbf16>
    %50 = arith.maximumf %48, %49 : vector<8x32xbf16>
    %c0_36 = arith.constant 0 : index
    %c0_37 = arith.constant 0 : index
    %51 = vector.load %arg14[%c0_36, %c0_37] : memref<32x128xbf16, #tpu.memory_space<vmem>>, vector<32x128xbf16>
    %cst_38 = arith.constant dense<0.000000e+00> : vector<8x128xf32>
    %52 = tpu.matmul %50, %51, %cst_38 {dimension_numbers = #tpu.dot_dimension_numbers<[1], [0], [0], [1], [0, 0, 1, 1], [], []>} : vector<8x32xbf16>, vector<32x128xbf16>, vector<8x128xf32> -> vector<8x128xf32>
    %c0_39 = arith.constant 0 : index
    %c0_40 = arith.constant 0 : index
    %53 = vector.load %arg15[%c0_39, %c0_40] : memref<1x128xf32, #tpu.memory_space<vmem>>, vector<1x128xf32>
    %54 = vector.broadcast %53 : vector<1x128xf32> to vector<8x128xf32>
    %55 = arith.addf %52, %54 : vector<8x128xf32>
    %c0_41 = arith.constant 0 : index
    %c0_42 = arith.constant 0 : index
    %56 = vector.load %arg16[%c0_41, %c0_42] : memref<8x128xf32, #tpu.memory_space<vmem>>, vector<8x128xf32>
    tpu.vector_store %arg16[%c0_41, %c0_42], %55 {strides = array<i32>} : memref<8x128xf32, #tpu.memory_space<vmem>>, vector<8x128xf32>,
    return
  }
  func.func @transform_0(%arg0: i32) -> (i32, i32) {
    %c0_i32 = arith.constant 0 : i32
    %c0_i32_0 = arith.constant 0 : i32
    return %arg0, %c0_i32 : i32, i32
  }
  func.func @transform_1(%arg0: i32) -> (i32, i32) {
    %c0_i32 = arith.constant 0 : i32
    %c0_i32_0 = arith.constant 0 : i32
    return %arg0, %c0_i32 : i32, i32
  }
  func.func @transform_2(%arg0: i32) -> (i32, i32) {
    %c0_i32 = arith.constant 0 : i32
    %c0_i32_0 = arith.constant 0 : i32
    %c0_i32_1 = arith.constant 0 : i32
    return %c0_i32, %c0_i32_0 : i32, i32
  }
  func.func @transform_3(%arg0: i32) -> (i32, i32) {
    %c0_i32 = arith.constant 0 : i32
    %c0_i32_0 = arith.constant 0 : i32
    %c0_i32_1 = arith.constant 0 : i32
    return %c0_i32, %c0_i32_0 : i32, i32
  }
  func.func @transform_4(%arg0: i32) -> (i32, i32) {
    %c0_i32 = arith.constant 0 : i32
    %c0_i32_0 = arith.constant 0 : i32
    %c0_i32_1 = arith.constant 0 : i32
    return %c0_i32, %c0_i32_0 : i32, i32
  }
  func.func @transform_5(%arg0: i32) -> (i32, i32) {
    %c0_i32 = arith.constant 0 : i32
    %c0_i32_0 = arith.constant 0 : i32
    %c0_i32_1 = arith.constant 0 : i32
    return %c0_i32, %c0_i32_0 : i32, i32
  }
  func.func @transform_6(%arg0: i32) -> (i32, i32) {
    %c0_i32 = arith.constant 0 : i32
    %c0_i32_0 = arith.constant 0 : i32
    %c0_i32_1 = arith.constant 0 : i32
    return %c0_i32, %c0_i32_0 : i32, i32
  }
  func.func @transform_7(%arg0: i32) -> (i32, i32) {
    %c0_i32 = arith.constant 0 : i32
    %c0_i32_0 = arith.constant 0 : i32
    %c0_i32_1 = arith.constant 0 : i32
    return %c0_i32, %c0_i32_0 : i32, i32
  }
  func.func @transform_8(%arg0: i32) -> (i32, i32) {
    %c0_i32 = arith.constant 0 : i32
    %c0_i32_0 = arith.constant 0 : i32
    %c0_i32_1 = arith.constant 0 : i32
    return %c0_i32, %c0_i32_0 : i32, i32
  }
  func.func @transform_9(%arg0: i32) -> (i32, i32) {
    %c0_i32 = arith.constant 0 : i32
    %c0_i32_0 = arith.constant 0 : i32
    %c0_i32_1 = arith.constant 0 : i32
    return %c0_i32, %c0_i32_0 : i32, i32
  }
  func.func @transform_10(%arg0: i32) -> (i32, i32) {
    %c0_i32 = arith.constant 0 : i32
    %c0_i32_0 = arith.constant 0 : i32
    %c0_i32_1 = arith.constant 0 : i32
    return %c0_i32, %c0_i32_0 : i32, i32
  }
  func.func @transform_11(%arg0: i32) -> (i32, i32) {
    %c0_i32 = arith.constant 0 : i32
    %c0_i32_0 = arith.constant 0 : i32
    %c0_i32_1 = arith.constant 0 : i32
    return %c0_i32, %c0_i32_0 : i32, i32
  }
  func.func @transform_12(%arg0: i32) -> (i32, i32) {
    %c0_i32 = arith.constant 0 : i32
    %c0_i32_0 = arith.constant 0 : i32
    %c0_i32_1 = arith.constant 0 : i32
    return %c0_i32, %c0_i32_0 : i32, i32
  }
  func.func @transform_13(%arg0: i32) -> (i32, i32) {
    %c0_i32 = arith.constant 0 : i32
    %c0_i32_0 = arith.constant 0 : i32
    %c0_i32_1 = arith.constant 0 : i32
    return %c0_i32, %c0_i32_0 : i32, i32
  }
  func.func @transform_14(%arg0: i32) -> (i32, i32) {
    %c0_i32 = arith.constant 0 : i32
    %c0_i32_0 = arith.constant 0 : i32
    %c0_i32_1 = arith.constant 0 : i32
    return %c0_i32, %c0_i32_0 : i32, i32
  }
  func.func @transform_15(%arg0: i32) -> (i32, i32) {
    %c0_i32 = arith.constant 0 : i32
    %c0_i32_0 = arith.constant 0 : i32
    return %arg0, %c0_i32 : i32, i32
  }
}

</mosaic_0001>

<llo_original>
// kernel: tpu_custom_call.1
$region0: #{tpu_custom_call.1}
  #allocation0 [shape = 'u32[]', space=smem, size = 0x4, offset = 0x4, fixed_abs, tag = 'smem constant byte address 0x4 - core index']
  #allocation1 [shape = 'u32[144,128]{1,0:T(1,128)}', space=vmem, size = 0x12000, scoped, tag = 'internal scratch']
  %s0 = inlined_call_operand.vmem [shape: bf16[1024,26], index: 0, kind: input, shape index: {}]
  %s1 = inlined_call_operand.vmem [shape: bf16[16,6], index: 1, kind: input, shape index: {}]
  %s2 = inlined_call_operand.vmem [shape: bf16[26,32], index: 2, kind: input, shape index: {}]
  %s3 = inlined_call_operand.vmem [shape: bf16[6,32], index: 3, kind: input, shape index: {}]
  %s4 = inlined_call_operand.vmem [shape: f32[1,32], index: 4, kind: input, shape index: {}]
  %s5 = inlined_call_operand.vmem [shape: bf16[32,32], index: 5, kind: input, shape index: {}]
  %s6 = inlined_call_operand.vmem [shape: f32[1,32], index: 6, kind: input, shape index: {}]
  %s7 = inlined_call_operand.vmem [shape: bf16[32,32], index: 7, kind: input, shape index: {}]
  %s8 = inlined_call_operand.vmem [shape: f32[1,32], index: 8, kind: input, shape index: {}]
  %s9 = inlined_call_operand.vmem [shape: bf16[32,32], index: 9, kind: input, shape index: {}]
  %s10 = inlined_call_operand.vmem [shape: f32[1,32], index: 10, kind: input, shape index: {}]
  %s11 = inlined_call_operand.vmem [shape: bf16[32,32], index: 11, kind: input, shape index: {}]
  %s12 = inlined_call_operand.vmem [shape: f32[1,32], index: 12, kind: input, shape index: {}]
  %s13 = inlined_call_operand.vmem [shape: bf16[32,128], index: 13, kind: input, shape index: {}]
  %s14 = inlined_call_operand.vmem [shape: f32[1,128], index: 14, kind: input, shape index: {}]
  %s15 = inlined_call_operand.hbm [shape: f32[16,128], index: 15, kind: output, shape index: {}]
  %s16 = sld [smem:[#allocation0]]
  $region93: #{tpu_custom_call.1} parent=0
    _
  %s18 = ssub.s32 1, %s16
  %s19 = scalar_select 0, %s18, %s16
  $region1: #{tpu_custom_call.1} parent=0
    #allocation2 [shape = 'u8[8192]{0}', space=vmem, size = 0x2000, scoped, tag = 'output window, operand 0']
    #allocation3 [shape = 's32[2]{0}', space=sflag, size = 0x8, scoped, tag = 'scoped memory for tpu_custom_call.1']
    %20 = vsyncpa [#allocation3], 0
    %s21 = scalar_lea.sflag [#allocation3], 1
    %22 = vsyncpa %s21, 0
    loop: start=0, step=1, limit=4
    $region2: #{tpu_custom_call.1} parent=1 // loop_pre_header
      _
    $region3: #{tpu_custom_call.1} parent=1 // loop_header
      %s24 = sphi 0, %s28
      %p25 = scmp.ge.s32.totalorder %s24, 4
      %s34 = sphi 0, %s36
      %s37 = sphi 0, %s34
      %s38 = sphi 0, %s37
      %s54 = sphi 0, %s38
      %s60 = sphi 0, %s62
      %s63 = sphi 0, %s60
      %s64 = sphi 0, %s63
      %s80 = sphi 0, %s64
      %s84 = sphi 0, %s84
      %s86 = sphi 0, %s84
      %s87 = sphi 0, %s86
      %s101 = sphi 0, %s87
      %s105 = sphi 0, %s105
      %s107 = sphi 0, %s105
      %s108 = sphi 0, %s107
      %s122 = sphi 0, %s108
      %s126 = sphi 0, %s126
      %s128 = sphi 0, %s126
      %s129 = sphi 0, %s128
      %s143 = sphi 0, %s129
      %s147 = sphi 0, %s147
      %s149 = sphi 0, %s147
      %s150 = sphi 0, %s149
      %s164 = sphi 0, %s150
      %s168 = sphi 0, %s168
      %s170 = sphi 0, %s168
      %s171 = sphi 0, %s170
      %s185 = sphi 0, %s171
      %s189 = sphi 0, %s189
      %s191 = sphi 0, %s189
      %s192 = sphi 0, %s191
      %s206 = sphi 0, %s192
      %s210 = sphi 0, %s210
      %s212 = sphi 0, %s210
      %s213 = sphi 0, %s212
      %s227 = sphi 0, %s213
      %s231 = sphi 0, %s231
      %s233 = sphi 0, %s231
      %s234 = sphi 0, %s233
      %s248 = sphi 0, %s234
      %s252 = sphi 0, %s252
      %s254 = sphi 0, %s252
      %s255 = sphi 0, %s254
      %s269 = sphi 0, %s255
      %s273 = sphi 0, %s273
      %s275 = sphi 0, %s273
      %s276 = sphi 0, %s275
      %s290 = sphi 0, %s276
      %s294 = sphi 0, %s294
      %s296 = sphi 0, %s294
      %s297 = sphi 0, %s296
      %s311 = sphi 0, %s297
      %s315 = sphi 0, %s315
      %s317 = sphi 0, %s315
      %s318 = sphi 0, %s317
      %s332 = sphi 0, %s318
      %s336 = sphi 0, %s336
      %s338 = sphi 0, %s336
      %s339 = sphi 0, %s338
      %s353 = sphi 0, %s339
      %s359 = sphi 0, %s361
      %s362 = sphi 0, %s359
      %s363 = sphi 0, %s362
      %s379 = sphi 0, %s363
    $region4: #{tpu_custom_call.1} parent=1 // loop_header_branch
      %27 = sbr.rel (%p25) target = $region8
    $region5: #{tpu_custom_call.1} parent=1 // loop_body
      %s29 = ssub.s32 %s24, 1
      %s30 = ssub.s32 %s24, 2
      %s31 = sadd.s32 %s24, 1
      %s32 = ssub.s32 %s24, %s31
      %p33 = scmp.eq.s32.totalorder %s32, 0
      %s35 = sadd.s32 %s34, 1
      %s36 = scalar_select %p33, %s34, %s35
      %p39 = pneg %p33
      %p40 = scmp.eq.s32.totalorder %s24, 1
      %p41 = por %p39, %p40
      %p42 = scmp.ne.s32.totalorder %s34, %s37
      %p43 = scmp.eq.s32.totalorder %s24, 0
      %p44 = por %p42, %p43
      %p45 = scmp.ne.s32.totalorder %s34, %s37
      %p46 = scmp.eq.s32.totalorder %s29, 1
      %p47 = por %p45, %p46
      %p48 = scmp.ne.s32.totalorder %s37, %s38
      %p49 = scmp.eq.s32.totalorder %s29, 0
      %p50 = por %p48, %p49
      %p51 = scmp.ne.s32.totalorder %s37, %s38
      %p52 = scmp.eq.s32.totalorder %s30, 1
      %p53 = por %p51, %p52
      %p55 = scmp.ne.s32.totalorder %s38, %s54
      %p56 = scmp.eq.s32.totalorder %s30, 0
      %p57 = por %p55, %p56
      %s58 = ssub.s32 %s24, %s31
      %p59 = scmp.eq.s32.totalorder %s58, 0
      %s61 = sadd.s32 %s60, 1
      %s62 = scalar_select %p59, %s60, %s61
      %p65 = pneg %p59
      %p66 = scmp.eq.s32.totalorder %s24, 1
      %p67 = por %p65, %p66
      %p68 = scmp.ne.s32.totalorder %s60, %s63
      %p69 = scmp.eq.s32.totalorder %s24, 0
      %p70 = por %p68, %p69
      %p71 = scmp.ne.s32.totalorder %s60, %s63
      %p72 = scmp.eq.s32.totalorder %s29, 1
      %p73 = por %p71, %p72
      %p74 = scmp.ne.s32.totalorder %s63, %s64
      %p75 = scmp.eq.s32.totalorder %s29, 0
      %p76 = por %p74, %p75
      %p77 = scmp.ne.s32.totalorder %s63, %s64
      %p78 = scmp.eq.s32.totalorder %s30, 1
      %p79 = por %p77, %p78
      %p81 = scmp.ne.s32.totalorder %s64, %s80
      %p82 = scmp.eq.s32.totalorder %s30, 0
      %p83 = por %p81, %p82
      %s85 = sadd.s32 %s84, 1
      %p88 = scmp.eq.s32.totalorder %s24, 1
      %p89 = scmp.ne.s32.totalorder %s84, %s86
      %p90 = scmp.eq.s32.totalorder %s24, 0
      %p91 = por %p89, %p90
      %p92 = scmp.ne.s32.totalorder %s84, %s86
      %p93 = scmp.eq.s32.totalorder %s29, 1
      %p94 = por %p92, %p93
      %p95 = scmp.ne.s32.totalorder %s86, %s87
      %p96 = scmp.eq.s32.totalorder %s29, 0
      %p97 = por %p95, %p96
      %p98 = scmp.ne.s32.totalorder %s86, %s87
      %p99 = scmp.eq.s32.totalorder %s30, 1
      %p100 = por %p98, %p99
      %p102 = scmp.ne.s32.totalorder %s87, %s101
      %p103 = scmp.eq.s32.totalorder %s30, 0
      %p104 = por %p102, %p103
      %s106 = sadd.s32 %s105, 1
      %p109 = scmp.eq.s32.totalorder %s24, 1
      %p110 = scmp.ne.s32.totalorder %s105, %s107
      %p111 = scmp.eq.s32.totalorder %s24, 0
      %p112 = por %p110, %p111
      %p113 = scmp.ne.s32.totalorder %s105, %s107
      %p114 = scmp.eq.s32.totalorder %s29, 1
      %p115 = por %p113, %p114
      %p116 = scmp.ne.s32.totalorder %s107, %s108
      %p117 = scmp.eq.s32.totalorder %s29, 0
      %p118 = por %p116, %p117
      %p119 = scmp.ne.s32.totalorder %s107, %s108
      %p120 = scmp.eq.s32.totalorder %s30, 1
      %p121 = por %p119, %p120
      %p123 = scmp.ne.s32.totalorder %s108, %s122
      %p124 = scmp.eq.s32.totalorder %s30, 0
      %p125 = por %p123, %p124
      %s127 = sadd.s32 %s126, 1
      %p130 = scmp.eq.s32.totalorder %s24, 1
      %p131 = scmp.ne.s32.totalorder %s126, %s128
      %p132 = scmp.eq.s32.totalorder %s24, 0
      %p133 = por %p131, %p132
      %p134 = scmp.ne.s32.totalorder %s126, %s128
      %p135 = scmp.eq.s32.totalorder %s29, 1
      %p136 = por %p134, %p135
      %p137 = scmp.ne.s32.totalorder %s128, %s129
      %p138 = scmp.eq.s32.totalorder %s29, 0
      %p139 = por %p137, %p138
      %p140 = scmp.ne.s32.totalorder %s128, %s129
      %p141 = scmp.eq.s32.totalorder %s30, 1
      %p142 = por %p140, %p141
      %p144 = scmp.ne.s32.totalorder %s129, %s143
      %p145 = scmp.eq.s32.totalorder %s30, 0
      %p146 = por %p144, %p145
      %s148 = sadd.s32 %s147, 1
      %p151 = scmp.eq.s32.totalorder %s24, 1
      %p152 = scmp.ne.s32.totalorder %s147, %s149
      %p153 = scmp.eq.s32.totalorder %s24, 0
      %p154 = por %p152, %p153
      %p155 = scmp.ne.s32.totalorder %s147, %s149
      %p156 = scmp.eq.s32.totalorder %s29, 1
      %p157 = por %p155, %p156
      %p158 = scmp.ne.s32.totalorder %s149, %s150
      %p159 = scmp.eq.s32.totalorder %s29, 0
      %p160 = por %p158, %p159
      %p161 = scmp.ne.s32.totalorder %s149, %s150
      %p162 = scmp.eq.s32.totalorder %s30, 1
      %p163 = por %p161, %p162
      %p165 = scmp.ne.s32.totalorder %s150, %s164
      %p166 = scmp.eq.s32.totalorder %s30, 0
      %p167 = por %p165, %p166
      %s169 = sadd.s32 %s168, 1
      %p172 = scmp.eq.s32.totalorder %s24, 1
      %p173 = scmp.ne.s32.totalorder %s168, %s170
      %p174 = scmp.eq.s32.totalorder %s24, 0
      %p175 = por %p173, %p174
      %p176 = scmp.ne.s32.totalorder %s168, %s170
      %p177 = scmp.eq.s32.totalorder %s29, 1
      %p178 = por %p176, %p177
      %p179 = scmp.ne.s32.totalorder %s170, %s171
      %p180 = scmp.eq.s32.totalorder %s29, 0
      %p181 = por %p179, %p180
      %p182 = scmp.ne.s32.totalorder %s170, %s171
      %p183 = scmp.eq.s32.totalorder %s30, 1
      %p184 = por %p182, %p183
      %p186 = scmp.ne.s32.totalorder %s171, %s185
      %p187 = scmp.eq.s32.totalorder %s30, 0
      %p188 = por %p186, %p187
      %s190 = sadd.s32 %s189, 1
      %p193 = scmp.eq.s32.totalorder %s24, 1
      %p194 = scmp.ne.s32.totalorder %s189, %s191
      %p195 = scmp.eq.s32.totalorder %s24, 0
      %p196 = por %p194, %p195
      %p197 = scmp.ne.s32.totalorder %s189, %s191
      %p198 = scmp.eq.s32.totalorder %s29, 1
      %p199 = por %p197, %p198
      %p200 = scmp.ne.s32.totalorder %s191, %s192
      %p201 = scmp.eq.s32.totalorder %s29, 0
      %p202 = por %p200, %p201
      %p203 = scmp.ne.s32.totalorder %s191, %s192
      %p204 = scmp.eq.s32.totalorder %s30, 1
      %p205 = por %p203, %p204
      %p207 = scmp.ne.s32.totalorder %s192, %s206
      %p208 = scmp.eq.s32.totalorder %s30, 0
      %p209 = por %p207, %p208
      %s211 = sadd.s32 %s210, 1
      %p214 = scmp.eq.s32.totalorder %s24, 1
      %p215 = scmp.ne.s32.totalorder %s210, %s212
      %p216 = scmp.eq.s32.totalorder %s24, 0
      %p217 = por %p215, %p216
      %p218 = scmp.ne.s32.totalorder %s210, %s212
      %p219 = scmp.eq.s32.totalorder %s29, 1
      %p220 = por %p218, %p219
      %p221 = scmp.ne.s32.totalorder %s212, %s213
      %p222 = scmp.eq.s32.totalorder %s29, 0
      %p223 = por %p221, %p222
      %p224 = scmp.ne.s32.totalorder %s212, %s213
      %p225 = scmp.eq.s32.totalorder %s30, 1
      %p226 = por %p224, %p225
      %p228 = scmp.ne.s32.totalorder %s213, %s227
      %p229 = scmp.eq.s32.totalorder %s30, 0
      %p230 = por %p228, %p229
      %s232 = sadd.s32 %s231, 1
      %p235 = scmp.eq.s32.totalorder %s24, 1
      %p236 = scmp.ne.s32.totalorder %s231, %s233
      %p237 = scmp.eq.s32.totalorder %s24, 0
      %p238 = por %p236, %p237
      %p239 = scmp.ne.s32.totalorder %s231, %s233
      %p240 = scmp.eq.s32.totalorder %s29, 1
      %p241 = por %p239, %p240
      %p242 = scmp.ne.s32.totalorder %s233, %s234
      %p243 = scmp.eq.s32.totalorder %s29, 0
      %p244 = por %p242, %p243
      %p245 = scmp.ne.s32.totalorder %s233, %s234
      %p246 = scmp.eq.s32.totalorder %s30, 1
      %p247 = por %p245, %p246
      %p249 = scmp.ne.s32.totalorder %s234, %s248
      %p250 = scmp.eq.s32.totalorder %s30, 0
      %p251 = por %p249, %p250
      %s253 = sadd.s32 %s252, 1
      %p256 = scmp.eq.s32.totalorder %s24, 1
      %p257 = scmp.ne.s32.totalorder %s252, %s254
      %p258 = scmp.eq.s32.totalorder %s24, 0
      %p259 = por %p257, %p258
      %p260 = scmp.ne.s32.totalorder %s252, %s254
      %p261 = scmp.eq.s32.totalorder %s29, 1
      %p262 = por %p260, %p261
      %p263 = scmp.ne.s32.totalorder %s254, %s255
      %p264 = scmp.eq.s32.totalorder %s29, 0
      %p265 = por %p263, %p264
      %p266 = scmp.ne.s32.totalorder %s254, %s255
      %p267 = scmp.eq.s32.totalorder %s30, 1
      %p268 = por %p266, %p267
      %p270 = scmp.ne.s32.totalorder %s255, %s269
      %p271 = scmp.eq.s32.totalorder %s30, 0
      %p272 = por %p270, %p271
      %s274 = sadd.s32 %s273, 1
      %p277 = scmp.eq.s32.totalorder %s24, 1
      %p278 = scmp.ne.s32.totalorder %s273, %s275
      %p279 = scmp.eq.s32.totalorder %s24, 0
      %p280 = por %p278, %p279
      %p281 = scmp.ne.s32.totalorder %s273, %s275
      %p282 = scmp.eq.s32.totalorder %s29, 1
      %p283 = por %p281, %p282
      %p284 = scmp.ne.s32.totalorder %s275, %s276
      %p285 = scmp.eq.s32.totalorder %s29, 0
      %p286 = por %p284, %p285
      %p287 = scmp.ne.s32.totalorder %s275, %s276
      %p288 = scmp.eq.s32.totalorder %s30, 1
      %p289 = por %p287, %p288
      %p291 = scmp.ne.s32.totalorder %s276, %s290
      %p292 = scmp.eq.s32.totalorder %s30, 0
      %p293 = por %p291, %p292
      %s295 = sadd.s32 %s294, 1
      %p298 = scmp.eq.s32.totalorder %s24, 1
      %p299 = scmp.ne.s32.totalorder %s294, %s296
      %p300 = scmp.eq.s32.totalorder %s24, 0
      %p301 = por %p299, %p300
      %p302 = scmp.ne.s32.totalorder %s294, %s296
      %p303 = scmp.eq.s32.totalorder %s29, 1
      %p304 = por %p302, %p303
      %p305 = scmp.ne.s32.totalorder %s296, %s297
      %p306 = scmp.eq.s32.totalorder %s29, 0
      %p307 = por %p305, %p306
      %p308 = scmp.ne.s32.totalorder %s296, %s297
      %p309 = scmp.eq.s32.totalorder %s30, 1
      %p310 = por %p308, %p309
      %p312 = scmp.ne.s32.totalorder %s297, %s311
      %p313 = scmp.eq.s32.totalorder %s30, 0
      %p314 = por %p312, %p313
      %s316 = sadd.s32 %s315, 1
      %p319 = scmp.eq.s32.totalorder %s24, 1
      %p320 = scmp.ne.s32.totalorder %s315, %s317
      %p321 = scmp.eq.s32.totalorder %s24, 0
      %p322 = por %p320, %p321
      %p323 = scmp.ne.s32.totalorder %s315, %s317
      %p324 = scmp.eq.s32.totalorder %s29, 1
      %p325 = por %p323, %p324
      %p326 = scmp.ne.s32.totalorder %s317, %s318
      %p327 = scmp.eq.s32.totalorder %s29, 0
      %p328 = por %p326, %p327
      %p329 = scmp.ne.s32.totalorder %s317, %s318
      %p330 = scmp.eq.s32.totalorder %s30, 1
      %p331 = por %p329, %p330
      %p333 = scmp.ne.s32.totalorder %s318, %s332
      %p334 = scmp.eq.s32.totalorder %s30, 0
      %p335 = por %p333, %p334
      %s337 = sadd.s32 %s336, 1
      %p340 = scmp.eq.s32.totalorder %s24, 1
      %p341 = scmp.ne.s32.totalorder %s336, %s338
      %p342 = scmp.eq.s32.totalorder %s24, 0
      %p343 = por %p341, %p342
      %p344 = scmp.ne.s32.totalorder %s336, %s338
      %p345 = scmp.eq.s32.totalorder %s29, 1
      %p346 = por %p344, %p345
      %p347 = scmp.ne.s32.totalorder %s338, %s339
      %p348 = scmp.eq.s32.totalorder %s29, 0
      %p349 = por %p347, %p348
      %p350 = scmp.ne.s32.totalorder %s338, %s339
      %p351 = scmp.eq.s32.totalorder %s30, 1
      %p352 = por %p350, %p351
      %p354 = scmp.ne.s32.totalorder %s339, %s353
      %p355 = scmp.eq.s32.totalorder %s30, 0
      %p356 = por %p354, %p355
      %s357 = ssub.s32 %s24, %s31
      %p358 = scmp.eq.s32.totalorder %s357, 0
      %s360 = sadd.s32 %s359, 1
      %s361 = scalar_select %p358, %s359, %s360
      %p364 = pneg %p358
      %p365 = scmp.eq.s32.totalorder %s24, 1
      %p366 = por %p364, %p365
      %p367 = scmp.ne.s32.totalorder %s359, %s362
      %p368 = scmp.eq.s32.totalorder %s24, 0
      %p369 = por %p367, %p368
      %p370 = scmp.ne.s32.totalorder %s359, %s362
      %p371 = scmp.eq.s32.totalorder %s29, 1
      %p372 = por %p370, %p371
      %p373 = scmp.ne.s32.totalorder %s362, %s363
      %p374 = scmp.eq.s32.totalorder %s29, 0
      %p375 = por %p373, %p374
      %p376 = scmp.ne.s32.totalorder %s362, %s363
      %p377 = scmp.eq.s32.totalorder %s30, 1
      %p378 = por %p376, %p377
      %p380 = scmp.ne.s32.totalorder %s363, %s379
      %p381 = scmp.eq.s32.totalorder %s30, 0
      %p382 = por %p380, %p381
      %p383 = scmp.le.s32.totalorder 1, %s24
      %p384 = scmp.lt.s32.totalorder %s24, 3
      %p385 = pnand %p383, %p384
      %p386 = pneg %p385
      // Predicated region
      $region9: #{tpu_custom_call.1} parent=5 // pred_check
        _
      $region10: #{tpu_custom_call.1} parent=5 // pred_check_branch
        %388 = sbr.rel (%p385) target = $region12
      $region11: #{tpu_custom_call.1} parent=5 // pred_region
        %s389 = ssub.s32 %s24, 1
        // Predicated region
        $region13: #{tpu_custom_call.1} parent=11 // pred_check
          %p390 = pneg %p97
        $region14: #{tpu_custom_call.1} parent=11 // pred_check_branch
          %392 = sbr.rel (%p390) target = $region16
        $region15: #{tpu_custom_call.1} parent=11 // pred_region
          _
        $region16: #{tpu_custom_call.1} parent=11 // pred_fallthru
          _
        // Predicated region
        $region17: #{tpu_custom_call.1} parent=11 // pred_check
          %p393 = pneg %p118
        $region18: #{tpu_custom_call.1} parent=11 // pred_check_branch
          %395 = sbr.rel (%p393) target = $region20
        $region19: #{tpu_custom_call.1} parent=11 // pred_region
          _
        $region20: #{tpu_custom_call.1} parent=11 // pred_fallthru
          _
        // Predicated region
        $region21: #{tpu_custom_call.1} parent=11 // pred_check
          %p396 = pneg %p139
        $region22: #{tpu_custom_call.1} parent=11 // pred_check_branch
          %398 = sbr.rel (%p396) target = $region24
        $region23: #{tpu_custom_call.1} parent=11 // pred_region
          _
        $region24: #{tpu_custom_call.1} parent=11 // pred_fallthru
          _
        // Predicated region
        $region25: #{tpu_custom_call.1} parent=11 // pred_check
          %p399 = pneg %p160
        $region26: #{tpu_custom_call.1} parent=11 // pred_check_branch
          %401 = sbr.rel (%p399) target = $region28
        $region27: #{tpu_custom_call.1} parent=11 // pred_region
          _
        $region28: #{tpu_custom_call.1} parent=11 // pred_fallthru
          _
        // Predicated region
        $region29: #{tpu_custom_call.1} parent=11 // pred_check
          %p402 = pneg %p181
        $region30: #{tpu_custom_call.1} parent=11 // pred_check_branch
          %404 = sbr.rel (%p402) target = $region32
        $region31: #{tpu_custom_call.1} parent=11 // pred_region
          _
        $region32: #{tpu_custom_call.1} parent=11 // pred_fallthru
          _
        // Predicated region
        $region33: #{tpu_custom_call.1} parent=11 // pred_check
          %p405 = pneg %p202
        $region34: #{tpu_custom_call.1} parent=11 // pred_check_branch
          %407 = sbr.rel (%p405) target = $region36
        $region35: #{tpu_custom_call.1} parent=11 // pred_region
          _
        $region36: #{tpu_custom_call.1} parent=11 // pred_fallthru
          _
        // Predicated region
        $region37: #{tpu_custom_call.1} parent=11 // pred_check
          %p408 = pneg %p223
        $region38: #{tpu_custom_call.1} parent=11 // pred_check_branch
          %410 = sbr.rel (%p408) target = $region40
        $region39: #{tpu_custom_call.1} parent=11 // pred_region
          _
        $region40: #{tpu_custom_call.1} parent=11 // pred_fallthru
          _
        // Predicated region
        $region41: #{tpu_custom_call.1} parent=11 // pred_check
          %p411 = pneg %p244
        $region42: #{tpu_custom_call.1} parent=11 // pred_check_branch
          %413 = sbr.rel (%p411) target = $region44
        $region43: #{tpu_custom_call.1} parent=11 // pred_region
          _
        $region44: #{tpu_custom_call.1} parent=11 // pred_fallthru
          _
        // Predicated region
        $region45: #{tpu_custom_call.1} parent=11 // pred_check
          %p414 = pneg %p265
        $region46: #{tpu_custom_call.1} parent=11 // pred_check_branch
          %416 = sbr.rel (%p414) target = $region48
        $region47: #{tpu_custom_call.1} parent=11 // pred_region
          _
        $region48: #{tpu_custom_call.1} parent=11 // pred_fallthru
          _
        // Predicated region
        $region49: #{tpu_custom_call.1} parent=11 // pred_check
          %p417 = pneg %p286
        $region50: #{tpu_custom_call.1} parent=11 // pred_check_branch
          %419 = sbr.rel (%p417) target = $region52
        $region51: #{tpu_custom_call.1} parent=11 // pred_region
          _
        $region52: #{tpu_custom_call.1} parent=11 // pred_fallthru
          _
        // Predicated region
        $region53: #{tpu_custom_call.1} parent=11 // pred_check
          %p420 = pneg %p307
        $region54: #{tpu_custom_call.1} parent=11 // pred_check_branch
          %422 = sbr.rel (%p420) target = $region56
        $region55: #{tpu_custom_call.1} parent=11 // pred_region
          _
        $region56: #{tpu_custom_call.1} parent=11 // pred_fallthru
          _
        // Predicated region
        $region57: #{tpu_custom_call.1} parent=11 // pred_check
          %p423 = pneg %p328
        $region58: #{tpu_custom_call.1} parent=11 // pred_check_branch
          %425 = sbr.rel (%p423) target = $region60
        $region59: #{tpu_custom_call.1} parent=11 // pred_region
          _
        $region60: #{tpu_custom_call.1} parent=11 // pred_fallthru
          _
        // Predicated region
        $region61: #{tpu_custom_call.1} parent=11 // pred_check
          %p426 = pneg %p349
        $region62: #{tpu_custom_call.1} parent=11 // pred_check_branch
          %428 = sbr.rel (%p426) target = $region64
        $region63: #{tpu_custom_call.1} parent=11 // pred_region
          _
        $region64: #{tpu_custom_call.1} parent=11 // pred_fallthru
          _
      $region12: #{tpu_custom_call.1} parent=5 // pred_fallthru
        _
      %p429 = scmp.lt.s32.totalorder %s24, 2
      // Predicated region
      $region65: #{tpu_custom_call.1} parent=5 // pred_check
        %p430 = pneg %p429
      $region66: #{tpu_custom_call.1} parent=5 // pred_check_branch
        %432 = sbr.rel (%p430) target = $region68
      $region67: #{tpu_custom_call.1} parent=5 // pred_region
        // Predicated region
        $region69: #{tpu_custom_call.1} parent=67 // pred_check
          %p433 = pneg %p44
        $region70: #{tpu_custom_call.1} parent=67 // pred_check_branch
          %435 = sbr.rel (%p433) target = $region72
        $region71: #{tpu_custom_call.1} parent=67 // pred_region
          %s436 = smul.u32 64, %s24
          %p437 = scmp.lt.s32.totalorder %s436, 127
          %s438 = scalar_select %p437, %s436, 127
          %s439 = smul.addr %s438, 4
          %s440 = scalar_lea.vmem %s0, %s439
          %s441 = smul.u32 64, %s24
        $region72: #{tpu_custom_call.1} parent=67 // pred_fallthru
          _
        // Predicated region
        $region73: #{tpu_custom_call.1} parent=67 // pred_check
          %p442 = pneg %p70
        $region74: #{tpu_custom_call.1} parent=67 // pred_check_branch
          %444 = sbr.rel (%p442) target = $region76
        $region75: #{tpu_custom_call.1} parent=67 // pred_region
          %p445 = scmp.lt.s32.totalorder %s24, 1
          %s446 = scalar_select %p445, %s24, 1
          %s447 = smul.addr %s446, 4
          %s448 = scalar_lea.vmem %s1, %s447
        $region76: #{tpu_custom_call.1} parent=67 // pred_fallthru
          _
      $region68: #{tpu_custom_call.1} parent=5 // pred_fallthru
        _
      %p449 = scmp.le.s32.totalorder 1, %s24
      %p450 = scmp.lt.s32.totalorder %s24, 3
      %p451 = pnand %p449, %p450
      %p452 = pneg %p451
      // Predicated region
      $region77: #{tpu_custom_call.1} parent=5 // pred_check
        _
      $region78: #{tpu_custom_call.1} parent=5 // pred_check_branch
        %454 = sbr.rel (%p451) target = $region80
      $region79: #{tpu_custom_call.1} parent=5 // pred_region
        %s455 = ssub.s32 %s24, 1
        %s456 = smul.u32 64, %s29
        %p457 = scmp.lt.s32.totalorder %s456, 127
        %s458 = scalar_select %p457, %s456, 127
        %s459 = smul.addr %s458, 4
        %s460 = scalar_lea.vmem %s0, %s459
        %p461 = pneg %p50
        %p462 = pneg %p47
        %p463 = scmp.lt.s32.totalorder %s29, 1
        %s464 = scalar_select %p463, %s29, 1
        %s465 = smul.addr %s464, 4
        %s466 = scalar_lea.vmem %s1, %s465
        %p467 = pneg %p76
        %p468 = pneg %p73
        %p469 = pneg %p97
        %p470 = pneg %p94
        %p471 = pneg %p118
        %p472 = pneg %p115
        %p473 = pneg %p139
        %p474 = pneg %p136
        %p475 = pneg %p160
        %p476 = pneg %p157
        %p477 = pneg %p181
        %p478 = pneg %p178
        %p479 = pneg %p202
        %p480 = pneg %p199
        %p481 = pneg %p223
        %p482 = pneg %p220
        %p483 = pneg %p244
        %p484 = pneg %p241
        %p485 = pneg %p265
        %p486 = pneg %p262
        %p487 = pneg %p286
        %p488 = pneg %p283
        %p489 = pneg %p307
        %p490 = pneg %p304
        %p491 = pneg %p328
        %p492 = pneg %p325
        %p493 = pneg %p349
        %p494 = pneg %p346
        %p495 = pneg %p375
        %p496 = pneg %p372
        %s497 = sand.u32 %s362, 1
        %s498 = scalar_lea.sflag [#allocation3], %s497
        %s499 = sand.u32 %s362, 1
        %s500 = smul.addr %s499, 8
        %s501 = scalar_lea.vmem [#allocation2], %s500
        %s502 = smul.u32 64, %s29
        %p503 = scmp.lt.s32.totalorder %s502, 127
        %s504 = scalar_select %p503, %s502, 127
        %s505 = smul.addr %s504, 4
        %s506 = scalar_lea.vmem %s0, %s505
        %s507 = smul.u32 64, %s29
        %p508 = scmp.lt.s32.totalorder %s29, 1
        %s509 = scalar_select %p508, %s29, 1
        %s510 = smul.addr %s509, 4
        %s511 = scalar_lea.vmem %s1, %s510
        %v513 = vld [vmem:[%s506] sm:$0xf]
        %v514 = vld [vmem:[%s506 + $0x4] sm:$0xf]
        %v515 = vld [vmem:[%s506 + $0x8] sm:$0xf]
        %v516 = vld [vmem:[%s506 + $0xc] sm:$0xf]
        %v517 = vld [vmem:[%s506 + $0x10] sm:$0xf]
        %v518 = vld [vmem:[%s506 + $0x14] sm:$0xf]
        %v519 = vld [vmem:[%s506 + $0x18] sm:$0xf]
        %v520 = vld [vmem:[%s506 + $0x1c] sm:$0xf]
        %v521 = vld [vmem:[%s506 + $0x20] sm:$0xf]
        %v522 = vld [vmem:[%s506 + $0x24] sm:$0xf]
        %v523 = vld [vmem:[%s506 + $0x28] sm:$0xf]
        %v524 = vld [vmem:[%s506 + $0x2c] sm:$0xf]
        %v525 = vld [vmem:[%s506 + $0x30] sm:$0xf]
        %v526 = vld [vmem:[%s506 + $0x34] sm:$0xf]
        %v527 = vld [vmem:[%s506 + $0x38] sm:$0xf]
        %v528 = vld [vmem:[%s506 + $0x3c] sm:$0xf]
        %v529 = vld [vmem:[%s506 + $0x40] sm:$0xf]
        %v530 = vld [vmem:[%s506 + $0x44] sm:$0xf]
        %v531 = vld [vmem:[%s506 + $0x48] sm:$0xf]
        %v532 = vld [vmem:[%s506 + $0x4c] sm:$0xf]
        %v533 = vld [vmem:[%s506 + $0x50] sm:$0xf]
        %v534 = vld [vmem:[%s506 + $0x54] sm:$0xf]
        %v535 = vld [vmem:[%s506 + $0x58] sm:$0xf]
        %v536 = vld [vmem:[%s506 + $0x5c] sm:$0xf]
        %v537 = vld [vmem:[%s506 + $0x60] sm:$0xf]
        %v538 = vld [vmem:[%s506 + $0x64] sm:$0xf]
        %v539 = vld [vmem:[%s506 + $0x68] sm:$0xf]
        %v540 = vld [vmem:[%s506 + $0x6c] sm:$0xf]
        %v541 = vld [vmem:[%s506 + $0x70] sm:$0xf]
        %v542 = vld [vmem:[%s506 + $0x74] sm:$0xf]
        %v543 = vld [vmem:[%s506 + $0x78] sm:$0xf]
        %v544 = vld [vmem:[%s506 + $0x7c] sm:$0xf]
        %v545 = vld [vmem:[%s506 + $0x80] sm:$0xf]
        %v546 = vld [vmem:[%s506 + $0x84] sm:$0xf]
        %v547 = vld [vmem:[%s506 + $0x88] sm:$0xf]
        %v548 = vld [vmem:[%s506 + $0x8c] sm:$0xf]
        %v549 = vld [vmem:[%s506 + $0x90] sm:$0xf]
        %v550 = vld [vmem:[%s506 + $0x94] sm:$0xf]
        %v551 = vld [vmem:[%s506 + $0x98] sm:$0xf]
        %v552 = vld [vmem:[%s506 + $0x9c] sm:$0xf]
        %v553 = vld [vmem:[%s506 + $0xa0] sm:$0xf]
        %v554 = vld [vmem:[%s506 + $0xa4] sm:$0xf]
        %v555 = vld [vmem:[%s506 + $0xa8] sm:$0xf]
        %v556 = vld [vmem:[%s506 + $0xac] sm:$0xf]
        %v557 = vld [vmem:[%s506 + $0xb0] sm:$0xf]
        %v558 = vld [vmem:[%s506 + $0xb4] sm:$0xf]
        %v559 = vld [vmem:[%s506 + $0xb8] sm:$0xf]
        %v560 = vld [vmem:[%s506 + $0xbc] sm:$0xf]
        %v561 = vld [vmem:[%s506 + $0xc0] sm:$0xf]
        %v562 = vld [vmem:[%s506 + $0xc4] sm:$0xf]
        %v563 = vld [vmem:[%s506 + $0xc8] sm:$0xf]
        %v564 = vld [vmem:[%s506 + $0xcc] sm:$0xf]
        %v565 = vld [vmem:[%s506 + $0xd0] sm:$0xf]
        %v566 = vld [vmem:[%s506 + $0xd4] sm:$0xf]
        %v567 = vld [vmem:[%s506 + $0xd8] sm:$0xf]
        %v568 = vld [vmem:[%s506 + $0xdc] sm:$0xf]
        %v569 = vld [vmem:[%s506 + $0xe0] sm:$0xf]
        %v570 = vld [vmem:[%s506 + $0xe4] sm:$0xf]
        %v571 = vld [vmem:[%s506 + $0xe8] sm:$0xf]
        %v572 = vld [vmem:[%s506 + $0xec] sm:$0xf]
        %v573 = vld [vmem:[%s506 + $0xf0] sm:$0xf]
        %v574 = vld [vmem:[%s506 + $0xf4] sm:$0xf]
        %v575 = vld [vmem:[%s506 + $0xf8] sm:$0xf]
        %v576 = vld [vmem:[%s506 + $0xfc] sm:$0xf]
        %v577 = vld [vmem:[%s2] sm:$0xf]
        %v578 = vld [vmem:[%s2 + $0x4] sm:$0xf]
        %v579 = vld [vmem:[%s2 + $0x8] sm:$0xf]
        %v580 = vld [vmem:[%s2 + $0xc] sm:$0x1]
        %v645 = vunpack.c.l.b16 %v513
        %v646 = vunpack.c.l.b16 %v514
        %v647 = vunpack.c.l.b16 %v515
        %v648 = vunpack.c.l.b16 %v516
        %v649 = vunpack.c.l.b16 %v517
        %v650 = vunpack.c.l.b16 %v518
        %v651 = vunpack.c.l.b16 %v519
        %v652 = vunpack.c.l.b16 %v520
        %v653 = vunpack.c.l.b16 %v521
        %v654 = vunpack.c.l.b16 %v522
        %v655 = vunpack.c.l.b16 %v523
        %v656 = vunpack.c.l.b16 %v524
        %v657 = vunpack.c.l.b16 %v525
        %v658 = vunpack.c.l.b16 %v526
        %v659 = vunpack.c.l.b16 %v527
        %v660 = vunpack.c.l.b16 %v528
        %v661 = vunpack.c.l.b16 %v529
        %v662 = vunpack.c.l.b16 %v530
        %v663 = vunpack.c.l.b16 %v531
        %v664 = vunpack.c.l.b16 %v532
        %v665 = vunpack.c.l.b16 %v533
        %v666 = vunpack.c.l.b16 %v534
        %v667 = vunpack.c.l.b16 %v535
        %v668 = vunpack.c.l.b16 %v536
        %v669 = vunpack.c.l.b16 %v537
        %v670 = vunpack.c.l.b16 %v538
        %v671 = vunpack.c.l.b16 %v539
        %v672 = vunpack.c.l.b16 %v540
        %v673 = vunpack.c.l.b16 %v541
        %v674 = vunpack.c.l.b16 %v542
        %v675 = vunpack.c.l.b16 %v543
        %v676 = vunpack.c.l.b16 %v544
        %v677 = vunpack.c.l.b16 %v545
        %v678 = vunpack.c.l.b16 %v546
        %v679 = vunpack.c.l.b16 %v547
        %v680 = vunpack.c.l.b16 %v548
        %v681 = vunpack.c.l.b16 %v549
        %v682 = vunpack.c.l.b16 %v550
        %v683 = vunpack.c.l.b16 %v551
        %v684 = vunpack.c.l.b16 %v552
        %v685 = vunpack.c.l.b16 %v553
        %v686 = vunpack.c.l.b16 %v554
        %v687 = vunpack.c.l.b16 %v555
        %v688 = vunpack.c.l.b16 %v556
        %v689 = vunpack.c.l.b16 %v557
        %v690 = vunpack.c.l.b16 %v558
        %v691 = vunpack.c.l.b16 %v559
        %v692 = vunpack.c.l.b16 %v560
        %v693 = vunpack.c.l.b16 %v561
        %v694 = vunpack.c.l.b16 %v562
        %v695 = vunpack.c.l.b16 %v563
        %v696 = vunpack.c.l.b16 %v564
        %v697 = vunpack.c.l.b16 %v565
        %v698 = vunpack.c.l.b16 %v566
        %v699 = vunpack.c.l.b16 %v567
        %v700 = vunpack.c.l.b16 %v568
        %v701 = vunpack.c.l.b16 %v569
        %v702 = vunpack.c.l.b16 %v570
        %v703 = vunpack.c.l.b16 %v571
        %v704 = vunpack.c.l.b16 %v572
        %v705 = vunpack.c.l.b16 %v573
        %v706 = vunpack.c.l.b16 %v574
        %v707 = vunpack.c.l.b16 %v575
        %v708 = vunpack.c.l.b16 %v576
        %v709 = vpack.c.b16 %v646, %v645
        %v710 = vpack.c.b16 %v648, %v647
        %v711 = vpack.c.b16 %v650, %v649
        %v712 = vpack.c.b16 %v652, %v651
        %v713 = vpack.c.b16 %v654, %v653
        %v714 = vpack.c.b16 %v656, %v655
        %v715 = vpack.c.b16 %v658, %v657
        %v716 = vpack.c.b16 %v660, %v659
        %v717 = vpack.c.b16 %v662, %v661
        %v718 = vpack.c.b16 %v664, %v663
        %v719 = vpack.c.b16 %v666, %v665
        %v720 = vpack.c.b16 %v668, %v667
        %v721 = vpack.c.b16 %v670, %v669
        %v722 = vpack.c.b16 %v672, %v671
        %v723 = vpack.c.b16 %v674, %v673
        %v724 = vpack.c.b16 %v676, %v675
        %v725 = vpack.c.b16 %v678, %v677
        %v726 = vpack.c.b16 %v680, %v679
        %v727 = vpack.c.b16 %v682, %v681
        %v728 = vpack.c.b16 %v684, %v683
        %v729 = vpack.c.b16 %v686, %v685
        %v730 = vpack.c.b16 %v688, %v687
        %v731 = vpack.c.b16 %v690, %v689
        %v732 = vpack.c.b16 %v692, %v691
        %v733 = vpack.c.b16 %v694, %v693
        %v734 = vpack.c.b16 %v696, %v695
        %v735 = vpack.c.b16 %v698, %v697
        %v736 = vpack.c.b16 %v700, %v699
        %v737 = vpack.c.b16 %v702, %v701
        %v738 = vpack.c.b16 %v704, %v703
        %v739 = vpack.c.b16 %v706, %v705
        %v740 = vpack.c.b16 %v708, %v707
        %v745 = vunpack.c.l.b16 %v577
        %v746 = vunpack.c.l.b16 %v578
        %v747 = vunpack.c.l.b16 %v579
        %v748 = vunpack.c.l.b16 %v580
        %v749 = vpack.c.b16 %v746, %v745
        %v750 = vpack.c.b16 %v748, %v747
        %vm752 = vcmask 211968
        %v754 = vsel %vm752, %v709, 0
        %v757 = vsel %vm752, %v710, 0
        %v760 = vsel %vm752, %v711, 0
        %v763 = vsel %vm752, %v712, 0
        %v766 = vsel %vm752, %v713, 0
        %v769 = vsel %vm752, %v714, 0
        %v772 = vsel %vm752, %v715, 0
        %v775 = vsel %vm752, %v716, 0
        %v778 = vsel %vm752, %v717, 0
        %v781 = vsel %vm752, %v718, 0
        %v784 = vsel %vm752, %v719, 0
        %v787 = vsel %vm752, %v720, 0
        %v790 = vsel %vm752, %v721, 0
        %v793 = vsel %vm752, %v722, 0
        %v796 = vsel %vm752, %v723, 0
        %v799 = vsel %vm752, %v724, 0
        %v802 = vsel %vm752, %v725, 0
        %v805 = vsel %vm752, %v726, 0
        %v808 = vsel %vm752, %v727, 0
        %v811 = vsel %vm752, %v728, 0
        %v814 = vsel %vm752, %v729, 0
        %v817 = vsel %vm752, %v730, 0
        %v820 = vsel %vm752, %v731, 0
        %v823 = vsel %vm752, %v732, 0
        %v826 = vsel %vm752, %v733, 0
        %v829 = vsel %vm752, %v734, 0
        %v832 = vsel %vm752, %v735, 0
        %v835 = vsel %vm752, %v736, 0
        %v838 = vsel %vm752, %v737, 0
        %v841 = vsel %vm752, %v738, 0
        %v844 = vsel %vm752, %v739, 0
        %v847 = vsel %vm752, %v740, 0
        %vm849 = vcmask 1044480
        %v851 = vsel %vm849, %v750, 0
        %853 = vmatprep.subr.bf16.mxu0 0
        %854 = vmatpush1.bf16.msra.mxu0 %v749
        %855 = vmatprep.subr.bf16.mxu0 0
        %856 = vmatpush1.bf16.msra.mxu0 %v851
        %857 = vmatprep.subr.bf16.mxu0 0
        %858 = vmatpush1.bf16.msra.mxu0 0
        %859 = vmatprep.subr.bf16.mxu0 0
        %860 = vmatpush1.bf16.msra.mxu0 0
        %861 = vmatprep.subr.bf16.mxu0 0
        %862 = vmatpush1.bf16.msra.mxu0 0
        %863 = vmatprep.subr.bf16.mxu0 0
        %864 = vmatpush1.bf16.msra.mxu0 0
        %865 = vmatprep.subr.bf16.mxu0 0
        %866 = vmatpush1.bf16.msra.mxu0 0
        %867 = vmatprep.subr.bf16.mxu0 0
        %868 = vmatpush1.bf16.msra.mxu0 0
        %869 = vmatprep.subr.bf16.mxu0 0
        %870 = vmatpush1.bf16.msra.mxu0 0
        %871 = vmatprep.subr.bf16.mxu0 0
        %872 = vmatpush1.bf16.msra.mxu0 0
        %873 = vmatprep.subr.bf16.mxu0 0
        %874 = vmatpush1.bf16.msra.mxu0 0
        %875 = vmatprep.subr.bf16.mxu0 0
        %876 = vmatpush1.bf16.msra.mxu0 0
        %877 = vmatprep.subr.bf16.mxu0 0
        %878 = vmatpush1.bf16.msra.mxu0 0
        %879 = vmatprep.subr.bf16.mxu0 0
        %880 = vmatpush1.bf16.msra.mxu0 0
        %881 = vmatprep.subr.bf16.mxu0 0
        %882 = vmatpush1.bf16.msra.mxu0 0
        %883 = vmatprep.subr.bf16.mxu0 0
        %884 = vmatpush1.bf16.msra.mxu0 0
        %885 = vmatprep.mubr.bf16.mxu0 0
        %886 = vmatmul.mubr.bf16.gmra.mrb[0].mxu0 %v754
        %v887 = vpop.f32.mrb[0].mxu0
        %v888 = vadd.f32 0.0, %v887
        %v889 = vpop.f32.mrb[0].mxu0
        %v890 = vpop.f32.mrb[0].mxu0
        %v891 = vadd.f32 0.0, %v890
        %v892 = vpop.f32.mrb[0].mxu0
        %893 = vmatprep.mubr.bf16.mxu0 0
        %894 = vmatmul.mubr.bf16.gmra.mrb[0].mxu0 %v757
        %v895 = vpop.f32.mrb[0].mxu0
        %v896 = vadd.f32 0.0, %v895
        %v897 = vpop.f32.mrb[0].mxu0
        %v898 = vpop.f32.mrb[0].mxu0
        %v899 = vadd.f32 0.0, %v898
        %v900 = vpop.f32.mrb[0].mxu0
        %901 = vmatprep.mubr.bf16.mxu0 0
        %902 = vmatmul.mubr.bf16.gmra.mrb[0].mxu0 %v760
        %v903 = vpop.f32.mrb[0].mxu0
        %v904 = vadd.f32 0.0, %v903
        %v905 = vpop.f32.mrb[0].mxu0
        %v906 = vpop.f32.mrb[0].mxu0
        %v907 = vadd.f32 0.0, %v906
        %v908 = vpop.f32.mrb[0].mxu0
        %909 = vmatprep.mubr.bf16.mxu0 0
        %910 = vmatmul.mubr.bf16.gmra.mrb[0].mxu0 %v763
        %v911 = vpop.f32.mrb[0].mxu0
        %v912 = vadd.f32 0.0, %v911
        %v913 = vpop.f32.mrb[0].mxu0
        %v914 = vpop.f32.mrb[0].mxu0
        %v915 = vadd.f32 0.0, %v914
        %v916 = vpop.f32.mrb[0].mxu0
        %917 = vmatprep.mubr.bf16.mxu0 0
        %918 = vmatmul.mubr.bf16.gmra.mrb[0].mxu0 %v766
        %v919 = vpop.f32.mrb[0].mxu0
        %v920 = vadd.f32 0.0, %v919
        %v921 = vpop.f32.mrb[0].mxu0
        %v922 = vpop.f32.mrb[0].mxu0
        %v923 = vadd.f32 0.0, %v922
        %v924 = vpop.f32.mrb[0].mxu0
        %925 = vmatprep.mubr.bf16.mxu0 0
        %926 = vmatmul.mubr.bf16.gmra.mrb[0].mxu0 %v769
        %v927 = vpop.f32.mrb[0].mxu0
        %v928 = vadd.f32 0.0, %v927
        %v929 = vpop.f32.mrb[0].mxu0
        %v930 = vpop.f32.mrb[0].mxu0
        %v931 = vadd.f32 0.0, %v930
        %v932 = vpop.f32.mrb[0].mxu0
        %933 = vmatprep.mubr.bf16.mxu0 0
        %934 = vmatmul.mubr.bf16.gmra.mrb[0].mxu0 %v772
        %v935 = vpop.f32.mrb[0].mxu0
        %v936 = vadd.f32 0.0, %v935
        %v937 = vpop.f32.mrb[0].mxu0
        %v938 = vpop.f32.mrb[0].mxu0
        %v939 = vadd.f32 0.0, %v938
        %v940 = vpop.f32.mrb[0].mxu0
        %941 = vmatprep.mubr.bf16.mxu0 0
        %942 = vmatmul.mubr.bf16.gmra.mrb[0].mxu0 %v775
        %v943 = vpop.f32.mrb[0].mxu0
        %v944 = vadd.f32 0.0, %v943
        %v945 = vpop.f32.mrb[0].mxu0
        %v946 = vpop.f32.mrb[0].mxu0
        %v947 = vadd.f32 0.0, %v946
        %v948 = vpop.f32.mrb[0].mxu0
        %949 = vmatprep.mubr.bf16.mxu0 0
        %950 = vmatmul.mubr.bf16.gmra.mrb[0].mxu0 %v778
        %v951 = vpop.f32.mrb[0].mxu0
        %v952 = vadd.f32 0.0, %v951
        %v953 = vpop.f32.mrb[0].mxu0
        %v954 = vpop.f32.mrb[0].mxu0
        %v955 = vadd.f32 0.0, %v954
        %v956 = vpop.f32.mrb[0].mxu0
        %957 = vmatprep.mubr.bf16.mxu0 0
        %958 = vmatmul.mubr.bf16.gmra.mrb[0].mxu0 %v781
        %v959 = vpop.f32.mrb[0].mxu0
        %v960 = vadd.f32 0.0, %v959
        %v961 = vpop.f32.mrb[0].mxu0
        %v962 = vpop.f32.mrb[0].mxu0
        %v963 = vadd.f32 0.0, %v962
        %v964 = vpop.f32.mrb[0].mxu0
        %965 = vmatprep.mubr.bf16.mxu0 0
        %966 = vmatmul.mubr.bf16.gmra.mrb[0].mxu0 %v784
        %v967 = vpop.f32.mrb[0].mxu0
        %v968 = vadd.f32 0.0, %v967
        %v969 = vpop.f32.mrb[0].mxu0
        %v970 = vpop.f32.mrb[0].mxu0
        %v971 = vadd.f32 0.0, %v970
        %v972 = vpop.f32.mrb[0].mxu0
        %973 = vmatprep.mubr.bf16.mxu0 0
        %974 = vmatmul.mubr.bf16.gmra.mrb[0].mxu0 %v787
        %v975 = vpop.f32.mrb[0].mxu0
        %v976 = vadd.f32 0.0, %v975
        %v977 = vpop.f32.mrb[0].mxu0
        %v978 = vpop.f32.mrb[0].mxu0
        %v979 = vadd.f32 0.0, %v978
        %v980 = vpop.f32.mrb[0].mxu0
        %981 = vmatprep.mubr.bf16.mxu0 0
        %982 = vmatmul.mubr.bf16.gmra.mrb[0].mxu0 %v790
        %v983 = vpop.f32.mrb[0].mxu0
        %v984 = vadd.f32 0.0, %v983
        %v985 = vpop.f32.mrb[0].mxu0
        %v986 = vpop.f32.mrb[0].mxu0
        %v987 = vadd.f32 0.0, %v986
        %v988 = vpop.f32.mrb[0].mxu0
        %989 = vmatprep.mubr.bf16.mxu0 0
        %990 = vmatmul.mubr.bf16.gmra.mrb[0].mxu0 %v793
        %v991 = vpop.f32.mrb[0].mxu0
        %v992 = vadd.f32 0.0, %v991
        %v993 = vpop.f32.mrb[0].mxu0
        %v994 = vpop.f32.mrb[0].mxu0
        %v995 = vadd.f32 0.0, %v994
        %v996 = vpop.f32.mrb[0].mxu0
        %997 = vmatprep.mubr.bf16.mxu0 0
        %998 = vmatmul.mubr.bf16.gmra.mrb[0].mxu0 %v796
        %v999 = vpop.f32.mrb[0].mxu0
        %v1000 = vadd.f32 0.0, %v999
        %v1001 = vpop.f32.mrb[0].mxu0
        %v1002 = vpop.f32.mrb[0].mxu0
        %v1003 = vadd.f32 0.0, %v1002
        %v1004 = vpop.f32.mrb[0].mxu0
        %1005 = vmatprep.mubr.bf16.mxu0 0
        %1006 = vmatmul.mubr.bf16.gmra.mrb[0].mxu0 %v799
        %v1007 = vpop.f32.mrb[0].mxu0
        %v1008 = vadd.f32 0.0, %v1007
        %v1009 = vpop.f32.mrb[0].mxu0
        %v1010 = vpop.f32.mrb[0].mxu0
        %v1011 = vadd.f32 0.0, %v1010
        %v1012 = vpop.f32.mrb[0].mxu0
        %1013 = vmatprep.mubr.bf16.mxu0 0
        %1014 = vmatmul.mubr.bf16.gmra.mrb[0].mxu0 %v802
        %v1015 = vpop.f32.mrb[0].mxu0
        %v1016 = vadd.f32 0.0, %v1015
        %v1017 = vpop.f32.mrb[0].mxu0
        %v1018 = vpop.f32.mrb[0].mxu0
        %v1019 = vadd.f32 0.0, %v1018
        %v1020 = vpop.f32.mrb[0].mxu0
        %1021 = vmatprep.mubr.bf16.mxu0 0
        %1022 = vmatmul.mubr.bf16.gmra.mrb[0].mxu0 %v805
        %v1023 = vpop.f32.mrb[0].mxu0
        %v1024 = vadd.f32 0.0, %v1023
        %v1025 = vpop.f32.mrb[0].mxu0
        %v1026 = vpop.f32.mrb[0].mxu0
        %v1027 = vadd.f32 0.0, %v1026
        %v1028 = vpop.f32.mrb[0].mxu0
        %1029 = vmatprep.mubr.bf16.mxu0 0
        %1030 = vmatmul.mubr.bf16.gmra.mrb[0].mxu0 %v808
        %v1031 = vpop.f32.mrb[0].mxu0
        %v1032 = vadd.f32 0.0, %v1031
        %v1033 = vpop.f32.mrb[0].mxu0
        %v1034 = vpop.f32.mrb[0].mxu0
        %v1035 = vadd.f32 0.0, %v1034
        %v1036 = vpop.f32.mrb[0].mxu0
        %1037 = vmatprep.mubr.bf16.mxu0 0
        %1038 = vmatmul.mubr.bf16.gmra.mrb[0].mxu0 %v811
        %v1039 = vpop.f32.mrb[0].mxu0
        %v1040 = vadd.f32 0.0, %v1039
        %v1041 = vpop.f32.mrb[0].mxu0
        %v1042 = vpop.f32.mrb[0].mxu0
        %v1043 = vadd.f32 0.0, %v1042
        %v1044 = vpop.f32.mrb[0].mxu0
        %1045 = vmatprep.mubr.bf16.mxu0 0
        %1046 = vmatmul.mubr.bf16.gmra.mrb[0].mxu0 %v814
        %v1047 = vpop.f32.mrb[0].mxu0
        %v1048 = vadd.f32 0.0, %v1047
        %v1049 = vpop.f32.mrb[0].mxu0
        %v1050 = vpop.f32.mrb[0].mxu0
        %v1051 = vadd.f32 0.0, %v1050
        %v1052 = vpop.f32.mrb[0].mxu0
        %1053 = vmatprep.mubr.bf16.mxu0 0
        %1054 = vmatmul.mubr.bf16.gmra.mrb[0].mxu0 %v817
        %v1055 = vpop.f32.mrb[0].mxu0
        %v1056 = vadd.f32 0.0, %v1055
        %v1057 = vpop.f32.mrb[0].mxu0
        %v1058 = vpop.f32.mrb[0].mxu0
        %v1059 = vadd.f32 0.0, %v1058
        %v1060 = vpop.f32.mrb[0].mxu0
        %1061 = vmatprep.mubr.bf16.mxu0 0
        %1062 = vmatmul.mubr.bf16.gmra.mrb[0].mxu0 %v820
        %v1063 = vpop.f32.mrb[0].mxu0
        %v1064 = vadd.f32 0.0, %v1063
        %v1065 = vpop.f32.mrb[0].mxu0
        %v1066 = vpop.f32.mrb[0].mxu0
        %v1067 = vadd.f32 0.0, %v1066
        %v1068 = vpop.f32.mrb[0].mxu0
        %1069 = vmatprep.mubr.bf16.mxu0 0
        %1070 = vmatmul.mubr.bf16.gmra.mrb[0].mxu0 %v823
        %v1071 = vpop.f32.mrb[0].mxu0
        %v1072 = vadd.f32 0.0, %v1071
        %v1073 = vpop.f32.mrb[0].mxu0
        %v1074 = vpop.f32.mrb[0].mxu0
        %v1075 = vadd.f32 0.0, %v1074
        %v1076 = vpop.f32.mrb[0].mxu0
        %1077 = vmatprep.mubr.bf16.mxu0 0
        %1078 = vmatmul.mubr.bf16.gmra.mrb[0].mxu0 %v826
        %v1079 = vpop.f32.mrb[0].mxu0
        %v1080 = vadd.f32 0.0, %v1079
        %v1081 = vpop.f32.mrb[0].mxu0
        %v1082 = vpop.f32.mrb[0].mxu0
        %v1083 = vadd.f32 0.0, %v1082
        %v1084 = vpop.f32.mrb[0].mxu0
        %1085 = vmatprep.mubr.bf16.mxu0 0
        %1086 = vmatmul.mubr.bf16.gmra.mrb[0].mxu0 %v829
        %v1087 = vpop.f32.mrb[0].mxu0
        %v1088 = vadd.f32 0.0, %v1087
        %v1089 = vpop.f32.mrb[0].mxu0
        %v1090 = vpop.f32.mrb[0].mxu0
        %v1091 = vadd.f32 0.0, %v1090
        %v1092 = vpop.f32.mrb[0].mxu0
        %1093 = vmatprep.mubr.bf16.mxu0 0
        %1094 = vmatmul.mubr.bf16.gmra.mrb[0].mxu0 %v832
        %v1095 = vpop.f32.mrb[0].mxu0
        %v1096 = vadd.f32 0.0, %v1095
        %v1097 = vpop.f32.mrb[0].mxu0
        %v1098 = vpop.f32.mrb[0].mxu0
        %v1099 = vadd.f32 0.0, %v1098
        %v1100 = vpop.f32.mrb[0].mxu0
        %1101 = vmatprep.mubr.bf16.mxu0 0
        %1102 = vmatmul.mubr.bf16.gmra.mrb[0].mxu0 %v835
        %v1103 = vpop.f32.mrb[0].mxu0
        %v1104 = vadd.f32 0.0, %v1103
        %v1105 = vpop.f32.mrb[0].mxu0
        %v1106 = vpop.f32.mrb[0].mxu0
        %v1107 = vadd.f32 0.0, %v1106
        %v1108 = vpop.f32.mrb[0].mxu0
        %1109 = vmatprep.mubr.bf16.mxu0 0
        %1110 = vmatmul.mubr.bf16.gmra.mrb[0].mxu0 %v838
        %v1111 = vpop.f32.mrb[0].mxu0
        %v1112 = vadd.f32 0.0, %v1111
        %v1113 = vpop.f32.mrb[0].mxu0
        %v1114 = vpop.f32.mrb[0].mxu0
        %v1115 = vadd.f32 0.0, %v1114
        %v1116 = vpop.f32.mrb[0].mxu0
        %1117 = vmatprep.mubr.bf16.mxu0 0
        %1118 = vmatmul.mubr.bf16.gmra.mrb[0].mxu0 %v841
        %v1119 = vpop.f32.mrb[0].mxu0
        %v1120 = vadd.f32 0.0, %v1119
        %v1121 = vpop.f32.mrb[0].mxu0
        %v1122 = vpop.f32.mrb[0].mxu0
        %v1123 = vadd.f32 0.0, %v1122
        %v1124 = vpop.f32.mrb[0].mxu0
        %1125 = vmatprep.mubr.bf16.mxu0 0
        %1126 = vmatmul.mubr.bf16.gmra.mrb[0].mxu0 %v844
        %v1127 = vpop.f32.mrb[0].mxu0
        %v1128 = vadd.f32 0.0, %v1127
        %v1129 = vpop.f32.mrb[0].mxu0
        %v1130 = vpop.f32.mrb[0].mxu0
        %v1131 = vadd.f32 0.0, %v1130
        %v1132 = vpop.f32.mrb[0].mxu0
        %1133 = vmatprep.mubr.bf16.mxu0 0
        %1134 = vmatmul.mubr.bf16.gmra.mrb[0].mxu0 %v847
        %v1135 = vpop.f32.mrb[0].mxu0
        %v1136 = vadd.f32 0.0, %v1135
        %v1137 = vpop.f32.mrb[0].mxu0
        %v1138 = vpop.f32.mrb[0].mxu0
        %v1139 = vadd.f32 0.0, %v1138
        %v1140 = vpop.f32.mrb[0].mxu0
        %1141 = vdwg.mxu0
        %v1142 = vld [vmem:[%s511] sm:$0xf]
        %v1143 = vld [vmem:[%s3] sm:$0x7]
        %v1144 = vld [vmem:[%s4] sm:$0x1]
        %v1146 = vlaneseq
        %v1147 = vshrl.u32 %v1146, 7
        %v1148 = vsub.s32 0, %v1147
        %v1149 = vrot.slane %v1144, %v1148
        %vm1151 = vcmask 48128
        %v1153 = vsel %vm1151, %v1142, 0
        %vm1155 = vcmask 1042432
        %v1157 = vsel %vm1155, %v1143, 0
        %1159 = vmatprep.subr.bf16.mxu0 0
        %1160 = vmatpush1.bf16.msra.mxu0 %v1157
        %1161 = vmatprep.subr.bf16.mxu0 0
        %1162 = vmatpush1.bf16.msra.mxu0 0
        %1163 = vmatprep.subr.bf16.mxu0 0
        %1164 = vmatpush1.bf16.msra.mxu0 0
        %1165 = vmatprep.subr.bf16.mxu0 0
        %1166 = vmatpush1.bf16.msra.mxu0 0
        %1167 = vmatprep.subr.bf16.mxu0 0
        %1168 = vmatpush1.bf16.msra.mxu0 0
        %1169 = vmatprep.subr.bf16.mxu0 0
        %1170 = vmatpush1.bf16.msra.mxu0 0
        %1171 = vmatprep.subr.bf16.mxu0 0
        %1172 = vmatpush1.bf16.msra.mxu0 0
        %1173 = vmatprep.subr.bf16.mxu0 0
        %1174 = vmatpush1.bf16.msra.mxu0 0
        %1175 = vmatprep.subr.bf16.mxu0 0
        %1176 = vmatpush1.bf16.msra.mxu0 0
        %1177 = vmatprep.subr.bf16.mxu0 0
        %1178 = vmatpush1.bf16.msra.mxu0 0
        %1179 = vmatprep.subr.bf16.mxu0 0
        %1180 = vmatpush1.bf16.msra.mxu0 0
        %1181 = vmatprep.subr.bf16.mxu0 0
        %1182 = vmatpush1.bf16.msra.mxu0 0
        %1183 = vmatprep.subr.bf16.mxu0 0
        %1184 = vmatpush1.bf16.msra.mxu0 0
        %1185 = vmatprep.subr.bf16.mxu0 0
        %1186 = vmatpush1.bf16.msra.mxu0 0
        %1187 = vmatprep.subr.bf16.mxu0 0
        %1188 = vmatpush1.bf16.msra.mxu0 0
        %1189 = vmatprep.subr.bf16.mxu0 0
        %1190 = vmatpush1.bf16.msra.mxu0 0
        %1191 = vmatprep.mubr.bf16.mxu0 0
        %1192 = vmatmul.mubr.bf16.gmra.mrb[0].mxu0 %v1153
        %v1193 = vpop.f32.mrb[0].mxu0
        %v1194 = vadd.f32 %v1149, %v1193
        %v1195 = vpop.f32.mrb[0].mxu0
        %v1196 = vpop.f32.mrb[0].mxu0
        %v1197 = vpop.f32.mrb[0].mxu0
        %1198 = vdwg.mxu0
        %v1200 = vcombine.high %v1194, %v1194
        %v1202 = vunpack.c.l.s4 1966171168
        %v1203 = vunpack.c.0.s8 %v1202
        %v1204 = vlaneseq
        %v1205 = vshrl.u32 %v1204, 7
        %v1206 = vsub.s32 %v1203, %v1205
        %v1207 = vrot.slane %v1194, %v1206
        %v1209 = vunpack.c.l.s4 1966171168
        %v1210 = vunpack.c.0.s8 %v1209
        %v1211 = vlaneseq
        %v1212 = vshrl.u32 %v1211, 7
        %v1213 = vsub.s32 %v1210, %v1212
        %v1214 = vrot.slane %v1200, %v1213
        %v1215 = vcombine.high %v1207, %v1207
        %v1216 = vcombine.high %v1214, %v1214
        %v1218 = vunpack.c.l.s4 1966171168
        %v1219 = vunpack.c.0.s8 %v1218
        %v1220 = vlaneseq
        %v1221 = vshrl.u32 %v1220, 7
        %v1222 = vsub.s32 %v1219, %v1221
        %v1223 = vrot.slane %v1207, %v1222
        %v1225 = vunpack.c.l.s4 1966171168
        %v1226 = vunpack.c.0.s8 %v1225
        %v1227 = vlaneseq
        %v1228 = vshrl.u32 %v1227, 7
        %v1229 = vsub.s32 %v1226, %v1228
        %v1230 = vrot.slane %v1214, %v1229
        %v1232 = vunpack.c.l.s4 1966171168
        %v1233 = vunpack.c.0.s8 %v1232
        %v1234 = vlaneseq
        %v1235 = vshrl.u32 %v1234, 7
        %v1236 = vsub.s32 %v1233, %v1235
        %v1237 = vrot.slane %v1215, %v1236
        %v1239 = vunpack.c.l.s4 1966171168
        %v1240 = vunpack.c.0.s8 %v1239
        %v1241 = vlaneseq
        %v1242 = vshrl.u32 %v1241, 7
        %v1243 = vsub.s32 %v1240, %v1242
        %v1244 = vrot.slane %v1216, %v1243
        %v1245 = vcombine.high %v1223, %v1223
        %v1246 = vcombine.high %v1230, %v1230
        %v1247 = vcombine.high %v1237, %v1237
        %v1248 = vcombine.high %v1244, %v1244
        %v1249 = vlaneseq
        %v1250 = vshrl.u32 %v1249, 7
        %v1251 = vsub.s32 0, %v1250
        %v1252 = vrot.slane %v1223, %v1251
        %v1253 = vlaneseq
        %v1254 = vshrl.u32 %v1253, 7
        %v1255 = vsub.s32 0, %v1254
        %v1256 = vrot.slane %v1237, %v1255
        %v1257 = vlaneseq
        %v1258 = vshrl.u32 %v1257, 7
        %v1259 = vsub.s32 0, %v1258
        %v1260 = vrot.slane %v1245, %v1259
        %v1261 = vlaneseq
        %v1262 = vshrl.u32 %v1261, 7
        %v1263 = vsub.s32 0, %v1262
        %v1264 = vrot.slane %v1247, %v1263
        %v1265 = vlaneseq
        %v1266 = vshrl.u32 %v1265, 7
        %v1267 = vsub.s32 0, %v1266
        %v1268 = vrot.slane %v1230, %v1267
        %v1269 = vlaneseq
        %v1270 = vshrl.u32 %v1269, 7
        %v1271 = vsub.s32 0, %v1270
        %v1272 = vrot.slane %v1244, %v1271
        %v1273 = vlaneseq
        %v1274 = vshrl.u32 %v1273, 7
        %v1275 = vsub.s32 0, %v1274
        %v1276 = vrot.slane %v1246, %v1275
        %v1277 = vlaneseq
        %v1278 = vshrl.u32 %v1277, 7
        %v1279 = vsub.s32 0, %v1278
        %v1280 = vrot.slane %v1248, %v1279
        %v1289 = vadd.f32 %v888, %v1252
        %v1290 = vadd.f32 %v891, %v1252
        %v1291 = vadd.f32 %v896, %v1252
        %v1292 = vadd.f32 %v899, %v1252
        %v1293 = vadd.f32 %v904, %v1252
        %v1294 = vadd.f32 %v907, %v1252
        %v1295 = vadd.f32 %v912, %v1252
        %v1296 = vadd.f32 %v915, %v1252
        %v1297 = vadd.f32 %v920, %v1256
        %v1298 = vadd.f32 %v923, %v1256
        %v1299 = vadd.f32 %v928, %v1256
        %v1300 = vadd.f32 %v931, %v1256
        %v1301 = vadd.f32 %v936, %v1256
        %v1302 = vadd.f32 %v939, %v1256
        %v1303 = vadd.f32 %v944, %v1256
        %v1304 = vadd.f32 %v947, %v1256
        %v1305 = vadd.f32 %v952, %v1260
        %v1306 = vadd.f32 %v955, %v1260
        %v1307 = vadd.f32 %v960, %v1260
        %v1308 = vadd.f32 %v963, %v1260
        %v1309 = vadd.f32 %v968, %v1260
        %v1310 = vadd.f32 %v971, %v1260
        %v1311 = vadd.f32 %v976, %v1260
        %v1312 = vadd.f32 %v979, %v1260
        %v1313 = vadd.f32 %v984, %v1264
        %v1314 = vadd.f32 %v987, %v1264
        %v1315 = vadd.f32 %v992, %v1264
        %v1316 = vadd.f32 %v995, %v1264
        %v1317 = vadd.f32 %v1000, %v1264
        %v1318 = vadd.f32 %v1003, %v1264
        %v1319 = vadd.f32 %v1008, %v1264
        %v1320 = vadd.f32 %v1011, %v1264
        %v1321 = vadd.f32 %v1016, %v1268
        %v1322 = vadd.f32 %v1019, %v1268
        %v1323 = vadd.f32 %v1024, %v1268
        %v1324 = vadd.f32 %v1027, %v1268
        %v1325 = vadd.f32 %v1032, %v1268
        %v1326 = vadd.f32 %v1035, %v1268
        %v1327 = vadd.f32 %v1040, %v1268
        %v1328 = vadd.f32 %v1043, %v1268
        %v1329 = vadd.f32 %v1048, %v1272
        %v1330 = vadd.f32 %v1051, %v1272
        %v1331 = vadd.f32 %v1056, %v1272
        %v1332 = vadd.f32 %v1059, %v1272
        %v1333 = vadd.f32 %v1064, %v1272
        %v1334 = vadd.f32 %v1067, %v1272
        %v1335 = vadd.f32 %v1072, %v1272
        %v1336 = vadd.f32 %v1075, %v1272
        %v1337 = vadd.f32 %v1080, %v1276
        %v1338 = vadd.f32 %v1083, %v1276
        %v1339 = vadd.f32 %v1088, %v1276
        %v1340 = vadd.f32 %v1091, %v1276
        %v1341 = vadd.f32 %v1096, %v1276
        %v1342 = vadd.f32 %v1099, %v1276
        %v1343 = vadd.f32 %v1104, %v1276
        %v1344 = vadd.f32 %v1107, %v1276
        %v1345 = vadd.f32 %v1112, %v1280
        %v1346 = vadd.f32 %v1115, %v1280
        %v1347 = vadd.f32 %v1120, %v1280
        %v1348 = vadd.f32 %v1123, %v1280
        %v1349 = vadd.f32 %v1128, %v1280
        %v1350 = vadd.f32 %v1131, %v1280
        %v1351 = vadd.f32 %v1136, %v1280
        %v1352 = vadd.f32 %v1139, %v1280
        %v1353 = vpack.c.bf16 %v1290, %v1289
        %v1354 = vpack.c.bf16 %v1292, %v1291
        %v1355 = vpack.c.bf16 %v1294, %v1293
        %v1356 = vpack.c.bf16 %v1296, %v1295
        %v1357 = vpack.c.bf16 %v1298, %v1297
        %v1358 = vpack.c.bf16 %v1300, %v1299
        %v1359 = vpack.c.bf16 %v1302, %v1301
        %v1360 = vpack.c.bf16 %v1304, %v1303
        %v1361 = vpack.c.bf16 %v1306, %v1305
        %v1362 = vpack.c.bf16 %v1308, %v1307
        %v1363 = vpack.c.bf16 %v1310, %v1309
        %v1364 = vpack.c.bf16 %v1312, %v1311
        %v1365 = vpack.c.bf16 %v1314, %v1313
        %v1366 = vpack.c.bf16 %v1316, %v1315
        %v1367 = vpack.c.bf16 %v1318, %v1317
        %v1368 = vpack.c.bf16 %v1320, %v1319
        %v1369 = vpack.c.bf16 %v1322, %v1321
        %v1370 = vpack.c.bf16 %v1324, %v1323
        %v1371 = vpack.c.bf16 %v1326, %v1325
        %v1372 = vpack.c.bf16 %v1328, %v1327
        %v1373 = vpack.c.bf16 %v1330, %v1329
        %v1374 = vpack.c.bf16 %v1332, %v1331
        %v1375 = vpack.c.bf16 %v1334, %v1333
        %v1376 = vpack.c.bf16 %v1336, %v1335
        %v1377 = vpack.c.bf16 %v1338, %v1337
        %v1378 = vpack.c.bf16 %v1340, %v1339
        %v1379 = vpack.c.bf16 %v1342, %v1341
        %v1380 = vpack.c.bf16 %v1344, %v1343
        %v1381 = vpack.c.bf16 %v1346, %v1345
        %v1382 = vpack.c.bf16 %v1348, %v1347
        %v1383 = vpack.c.bf16 %v1350, %v1349
        %v1384 = vpack.c.bf16 %v1352, %v1351
        %v1385 = vmax.bf16 %v1353, 0
        %v1386 = vmax.bf16 %v1354, 0
        %v1387 = vmax.bf16 %v1355, 0
        %v1388 = vmax.bf16 %v1356, 0
        %v1389 = vmax.bf16 %v1357, 0
        %v1390 = vmax.bf16 %v1358, 0
        %v1391 = vmax.bf16 %v1359, 0
        %v1392 = vmax.bf16 %v1360, 0
        %v1393 = vmax.bf16 %v1361, 0
        %v1394 = vmax.bf16 %v1362, 0
        %v1395 = vmax.bf16 %v1363, 0
        %v1396 = vmax.bf16 %v1364, 0
        %v1397 = vmax.bf16 %v1365, 0
        %v1398 = vmax.bf16 %v1366, 0
        %v1399 = vmax.bf16 %v1367, 0
        %v1400 = vmax.bf16 %v1368, 0
        %v1401 = vmax.bf16 %v1369, 0
        %v1402 = vmax.bf16 %v1370, 0
        %v1403 = vmax.bf16 %v1371, 0
        %v1404 = vmax.bf16 %v1372, 0
        %v1405 = vmax.bf16 %v1373, 0
        %v1406 = vmax.bf16 %v1374, 0
        %v1407 = vmax.bf16 %v1375, 0
        %v1408 = vmax.bf16 %v1376, 0
        %v1409 = vmax.bf16 %v1377, 0
        %v1410 = vmax.bf16 %v1378, 0
        %v1411 = vmax.bf16 %v1379, 0
        %v1412 = vmax.bf16 %v1380, 0
        %v1413 = vmax.bf16 %v1381, 0
        %v1414 = vmax.bf16 %v1382, 0
        %v1415 = vmax.bf16 %v1383, 0
        %v1416 = vmax.bf16 %v1384, 0
        %v1417 = vld [vmem:[%s5] sm:$0xf]
        %v1418 = vld [vmem:[%s5 + $0x4] sm:$0xf]
        %v1419 = vld [vmem:[%s5 + $0x8] sm:$0xf]
        %v1420 = vld [vmem:[%s5 + $0xc] sm:$0xf]
        %v1421 = vld [vmem:[%s6] sm:$0x1]
        %v1423 = vlaneseq
        %v1424 = vshrl.u32 %v1423, 7
        %v1425 = vsub.s32 0, %v1424
        %v1426 = vrot.slane %v1421, %v1425
        %v1432 = vunpack.c.l.b16 %v1417
        %v1433 = vunpack.c.l.b16 %v1418
        %v1434 = vunpack.c.l.b16 %v1419
        %v1435 = vunpack.c.l.b16 %v1420
        %v1436 = vpack.c.b16 %v1433, %v1432
        %v1437 = vpack.c.b16 %v1435, %v1434
        %vm1440 = vcmask 261120
        %v1442 = vsel %vm1440, %v1385, 0
        %v1445 = vsel %vm1440, %v1386, 0
        %v1448 = vsel %vm1440, %v1387, 0
        %v1451 = vsel %vm1440, %v1388, 0
        %v1454 = vsel %vm1440, %v1389, 0
        %v1457 = vsel %vm1440, %v1390, 0
        %v1460 = vsel %vm1440, %v1391, 0
        %v1463 = vsel %vm1440, %v1392, 0
        %v1466 = vsel %vm1440, %v1393, 0
        %v1469 = vsel %vm1440, %v1394, 0
        %v1472 = vsel %vm1440, %v1395, 0
        %v1475 = vsel %vm1440, %v1396, 0
        %v1478 = vsel %vm1440, %v1397, 0
        %v1481 = vsel %vm1440, %v1398, 0
        %v1484 = vsel %vm1440, %v1399, 0
        %v1487 = vsel %vm1440, %v1400, 0
        %v1490 = vsel %vm1440, %v1401, 0
        %v1493 = vsel %vm1440, %v1402, 0
        %v1496 = vsel %vm1440, %v1403, 0
        %v1499 = vsel %vm1440, %v1404, 0
        %v1502 = vsel %vm1440, %v1405, 0
        %v1505 = vsel %vm1440, %v1406, 0
        %v1508 = vsel %vm1440, %v1407, 0
        %v1511 = vsel %vm1440, %v1408, 0
        %v1514 = vsel %vm1440, %v1409, 0
        %v1517 = vsel %vm1440, %v1410, 0
        %v1520 = vsel %vm1440, %v1411, 0
        %v1523 = vsel %vm1440, %v1412, 0
        %v1526 = vsel %vm1440, %v1413, 0
        %v1529 = vsel %vm1440, %v1414, 0
        %v1532 = vsel %vm1440, %v1415, 0
        %v1535 = vsel %vm1440, %v1416, 0
        %1537 = vmatprep.subr.bf16.mxu0 0
        %1538 = vmatpush1.bf16.msra.mxu0 %v1436
        %1539 = vmatprep.subr.bf16.mxu0 0
        %1540 = vmatpush1.bf16.msra.mxu0 %v1437
        %1541 = vmatprep.subr.bf16.mxu0 0
        %1542 = vmatpush1.bf16.msra.mxu0 0
        %1543 = vmatprep.subr.bf16.mxu0 0
        %1544 = vmatpush1.bf16.msra.mxu0 0
        %1545 = vmatprep.subr.bf16.mxu0 0
        %1546 = vmatpush1.bf16.msra.mxu0 0
        %1547 = vmatprep.subr.bf16.mxu0 0
        %1548 = vmatpush1.bf16.msra.mxu0 0
        %1549 = vmatprep.subr.bf16.mxu0 0
        %1550 = vmatpush1.bf16.msra.mxu0 0
        %1551 = vmatprep.subr.bf16.mxu0 0
        %1552 = vmatpush1.bf16.msra.mxu0 0
        %1553 = vmatprep.subr.bf16.mxu0 0
        %1554 = vmatpush1.bf16.msra.mxu0 0
        %1555 = vmatprep.subr.bf16.mxu0 0
        %1556 = vmatpush1.bf16.msra.mxu0 0
        %1557 = vmatprep.subr.bf16.mxu0 0
        %1558 = vmatpush1.bf16.msra.mxu0 0
        %1559 = vmatprep.subr.bf16.mxu0 0
        %1560 = vmatpush1.bf16.msra.mxu0 0
        %1561 = vmatprep.subr.bf16.mxu0 0
        %1562 = vmatpush1.bf16.msra.mxu0 0
        %1563 = vmatprep.subr.bf16.mxu0 0
        %1564 = vmatpush1.bf16.msra.mxu0 0
        %1565 = vmatprep.subr.bf16.mxu0 0
        %1566 = vmatpush1.bf16.msra.mxu0 0
        %1567 = vmatprep.subr.bf16.mxu0 0
        %1568 = vmatpush1.bf16.msra.mxu0 0
        %1569 = vmatprep.mubr.bf16.mxu0 0
        %1570 = vmatmul.mubr.bf16.gmra.mrb[0].mxu0 %v1442
        %v1571 = vpop.f32.mrb[0].mxu0
        %v1572 = vadd.f32 %v1426, %v1571
        %v1573 = vpop.f32.mrb[0].mxu0
        %v1574 = vpop.f32.mrb[0].mxu0
        %v1575 = vadd.f32 %v1426, %v1574
        %v1576 = vpop.f32.mrb[0].mxu0
        %1577 = vmatprep.mubr.bf16.mxu0 0
        %1578 = vmatmul.mubr.bf16.gmra.mrb[0].mxu0 %v1445
        %v1579 = vpop.f32.mrb[0].mxu0
        %v1580 = vadd.f32 %v1426, %v1579
        %v1581 = vpop.f32.mrb[0].mxu0
        %v1582 = vpop.f32.mrb[0].mxu0
        %v1583 = vadd.f32 %v1426, %v1582
        %v1584 = vpop.f32.mrb[0].mxu0
        %1585 = vmatprep.mubr.bf16.mxu0 0
        %1586 = vmatmul.mubr.bf16.gmra.mrb[0].mxu0 %v1448
        %v1587 = vpop.f32.mrb[0].mxu0
        %v1588 = vadd.f32 %v1426, %v1587
        %v1589 = vpop.f32.mrb[0].mxu0
        %v1590 = vpop.f32.mrb[0].mxu0
        %v1591 = vadd.f32 %v1426, %v1590
        %v1592 = vpop.f32.mrb[0].mxu0
        %1593 = vmatprep.mubr.bf16.mxu0 0
        %1594 = vmatmul.mubr.bf16.gmra.mrb[0].mxu0 %v1451
        %v1595 = vpop.f32.mrb[0].mxu0
        %v1596 = vadd.f32 %v1426, %v1595
        %v1597 = vpop.f32.mrb[0].mxu0
        %v1598 = vpop.f32.mrb[0].mxu0
        %v1599 = vadd.f32 %v1426, %v1598
        %v1600 = vpop.f32.mrb[0].mxu0
        %1601 = vmatprep.mubr.bf16.mxu0 0
        %1602 = vmatmul.mubr.bf16.gmra.mrb[0].mxu0 %v1454
        %v1603 = vpop.f32.mrb[0].mxu0
        %v1604 = vadd.f32 %v1426, %v1603
        %v1605 = vpop.f32.mrb[0].mxu0
        %v1606 = vpop.f32.mrb[0].mxu0
        %v1607 = vadd.f32 %v1426, %v1606
        %v1608 = vpop.f32.mrb[0].mxu0
        %1609 = vmatprep.mubr.bf16.mxu0 0
        %1610 = vmatmul.mubr.bf16.gmra.mrb[0].mxu0 %v1457
        %v1611 = vpop.f32.mrb[0].mxu0
        %v1612 = vadd.f32 %v1426, %v1611
        %v1613 = vpop.f32.mrb[0].mxu0
        %v1614 = vpop.f32.mrb[0].mxu0
        %v1615 = vadd.f32 %v1426, %v1614
        %v1616 = vpop.f32.mrb[0].mxu0
        %1617 = vmatprep.mubr.bf16.mxu0 0
        %1618 = vmatmul.mubr.bf16.gmra.mrb[0].mxu0 %v1460
        %v1619 = vpop.f32.mrb[0].mxu0
        %v1620 = vadd.f32 %v1426, %v1619
        %v1621 = vpop.f32.mrb[0].mxu0
        %v1622 = vpop.f32.mrb[0].mxu0
        %v1623 = vadd.f32 %v1426, %v1622
        %v1624 = vpop.f32.mrb[0].mxu0
        %1625 = vmatprep.mubr.bf16.mxu0 0
        %1626 = vmatmul.mubr.bf16.gmra.mrb[0].mxu0 %v1463
        %v1627 = vpop.f32.mrb[0].mxu0
        %v1628 = vadd.f32 %v1426, %v1627
        %v1629 = vpop.f32.mrb[0].mxu0
        %v1630 = vpop.f32.mrb[0].mxu0
        %v1631 = vadd.f32 %v1426, %v1630
        %v1632 = vpop.f32.mrb[0].mxu0
        %1633 = vmatprep.mubr.bf16.mxu0 0
        %1634 = vmatmul.mubr.bf16.gmra.mrb[0].mxu0 %v1466
        %v1635 = vpop.f32.mrb[0].mxu0
        %v1636 = vadd.f32 %v1426, %v1635
        %v1637 = vpop.f32.mrb[0].mxu0
        %v1638 = vpop.f32.mrb[0].mxu0
        %v1639 = vadd.f32 %v1426, %v1638
        %v1640 = vpop.f32.mrb[0].mxu0
        %1641 = vmatprep.mubr.bf16.mxu0 0
        %1642 = vmatmul.mubr.bf16.gmra.mrb[0].mxu0 %v1469
        %v1643 = vpop.f32.mrb[0].mxu0
        %v1644 = vadd.f32 %v1426, %v1643
        %v1645 = vpop.f32.mrb[0].mxu0
        %v1646 = vpop.f32.mrb[0].mxu0
        %v1647 = vadd.f32 %v1426, %v1646
        %v1648 = vpop.f32.mrb[0].mxu0
        %1649 = vmatprep.mubr.bf16.mxu0 0
        %1650 = vmatmul.mubr.bf16.gmra.mrb[0].mxu0 %v1472
        %v1651 = vpop.f32.mrb[0].mxu0
        %v1652 = vadd.f32 %v1426, %v1651
        %v1653 = vpop.f32.mrb[0].mxu0
        %v1654 = vpop.f32.mrb[0].mxu0
        %v1655 = vadd.f32 %v1426, %v1654
        %v1656 = vpop.f32.mrb[0].mxu0
        %1657 = vmatprep.mubr.bf16.mxu0 0
        %1658 = vmatmul.mubr.bf16.gmra.mrb[0].mxu0 %v1475
        %v1659 = vpop.f32.mrb[0].mxu0
        %v1660 = vadd.f32 %v1426, %v1659
        %v1661 = vpop.f32.mrb[0].mxu0
        %v1662 = vpop.f32.mrb[0].mxu0
        %v1663 = vadd.f32 %v1426, %v1662
        %v1664 = vpop.f32.mrb[0].mxu0
        %1665 = vmatprep.mubr.bf16.mxu0 0
        %1666 = vmatmul.mubr.bf16.gmra.mrb[0].mxu0 %v1478
        %v1667 = vpop.f32.mrb[0].mxu0
        %v1668 = vadd.f32 %v1426, %v1667
        %v1669 = vpop.f32.mrb[0].mxu0
        %v1670 = vpop.f32.mrb[0].mxu0
        %v1671 = vadd.f32 %v1426, %v1670
        %v1672 = vpop.f32.mrb[0].mxu0
        %1673 = vmatprep.mubr.bf16.mxu0 0
        %1674 = vmatmul.mubr.bf16.gmra.mrb[0].mxu0 %v1481
        %v1675 = vpop.f32.mrb[0].mxu0
        %v1676 = vadd.f32 %v1426, %v1675
        %v1677 = vpop.f32.mrb[0].mxu0
        %v1678 = vpop.f32.mrb[0].mxu0
        %v1679 = vadd.f32 %v1426, %v1678
        %v1680 = vpop.f32.mrb[0].mxu0
        %1681 = vmatprep.mubr.bf16.mxu0 0
        %1682 = vmatmul.mubr.bf16.gmra.mrb[0].mxu0 %v1484
        %v1683 = vpop.f32.mrb[0].mxu0
        %v1684 = vadd.f32 %v1426, %v1683
        %v1685 = vpop.f32.mrb[0].mxu0
        %v1686 = vpop.f32.mrb[0].mxu0
        %v1687 = vadd.f32 %v1426, %v1686
        %v1688 = vpop.f32.mrb[0].mxu0
        %1689 = vmatprep.mubr.bf16.mxu0 0
        %1690 = vmatmul.mubr.bf16.gmra.mrb[0].mxu0 %v1487
        %v1691 = vpop.f32.mrb[0].mxu0
        %v1692 = vadd.f32 %v1426, %v1691
        %v1693 = vpop.f32.mrb[0].mxu0
        %v1694 = vpop.f32.mrb[0].mxu0
        %v1695 = vadd.f32 %v1426, %v1694
        %v1696 = vpop.f32.mrb[0].mxu0
        %1697 = vmatprep.mubr.bf16.mxu0 0
        %1698 = vmatmul.mubr.bf16.gmra.mrb[0].mxu0 %v1490
        %v1699 = vpop.f32.mrb[0].mxu0
        %v1700 = vadd.f32 %v1426, %v1699
        %v1701 = vpop.f32.mrb[0].mxu0
        %v1702 = vpop.f32.mrb[0].mxu0
        %v1703 = vadd.f32 %v1426, %v1702
        %v1704 = vpop.f32.mrb[0].mxu0
        %1705 = vmatprep.mubr.bf16.mxu0 0
        %1706 = vmatmul.mubr.bf16.gmra.mrb[0].mxu0 %v1493
        %v1707 = vpop.f32.mrb[0].mxu0
        %v1708 = vadd.f32 %v1426, %v1707
        %v1709 = vpop.f32.mrb[0].mxu0
        %v1710 = vpop.f32.mrb[0].mxu0
        %v1711 = vadd.f32 %v1426, %v1710
        %v1712 = vpop.f32.mrb[0].mxu0
        %1713 = vmatprep.mubr.bf16.mxu0 0
        %1714 = vmatmul.mubr.bf16.gmra.mrb[0].mxu0 %v1496
        %v1715 = vpop.f32.mrb[0].mxu0
        %v1716 = vadd.f32 %v1426, %v1715
        %v1717 = vpop.f32.mrb[0].mxu0
        %v1718 = vpop.f32.mrb[0].mxu0
        %v1719 = vadd.f32 %v1426, %v1718
        %v1720 = vpop.f32.mrb[0].mxu0
        %1721 = vmatprep.mubr.bf16.mxu0 0
        %1722 = vmatmul.mubr.bf16.gmra.mrb[0].mxu0 %v1499
        %v1723 = vpop.f32.mrb[0].mxu0
        %v1724 = vadd.f32 %v1426, %v1723
        %v1725 = vpop.f32.mrb[0].mxu0
        %v1726 = vpop.f32.mrb[0].mxu0
        %v1727 = vadd.f32 %v1426, %v1726
        %v1728 = vpop.f32.mrb[0].mxu0
        %1729 = vmatprep.mubr.bf16.mxu0 0
        %1730 = vmatmul.mubr.bf16.gmra.mrb[0].mxu0 %v1502
        %v1731 = vpop.f32.mrb[0].mxu0
        %v1732 = vadd.f32 %v1426, %v1731
        %v1733 = vpop.f32.mrb[0].mxu0
        %v1734 = vpop.f32.mrb[0].mxu0
        %v1735 = vadd.f32 %v1426, %v1734
        %v1736 = vpop.f32.mrb[0].mxu0
        %1737 = vmatprep.mubr.bf16.mxu0 0
        %1738 = vmatmul.mubr.bf16.gmra.mrb[0].mxu0 %v1505
        %v1739 = vpop.f32.mrb[0].mxu0
        %v1740 = vadd.f32 %v1426, %v1739
        %v1741 = vpop.f32.mrb[0].mxu0
        %v1742 = vpop.f32.mrb[0].mxu0
        %v1743 = vadd.f32 %v1426, %v1742
        %v1744 = vpop.f32.mrb[0].mxu0
        %1745 = vmatprep.mubr.bf16.mxu0 0
        %1746 = vmatmul.mubr.bf16.gmra.mrb[0].mxu0 %v1508
        %v1747 = vpop.f32.mrb[0].mxu0
        %v1748 = vadd.f32 %v1426, %v1747
        %v1749 = vpop.f32.mrb[0].mxu0
        %v1750 = vpop.f32.mrb[0].mxu0
        %v1751 = vadd.f32 %v1426, %v1750
        %v1752 = vpop.f32.mrb[0].mxu0
        %1753 = vmatprep.mubr.bf16.mxu0 0
        %1754 = vmatmul.mubr.bf16.gmra.mrb[0].mxu0 %v1511
        %v1755 = vpop.f32.mrb[0].mxu0
        %v1756 = vadd.f32 %v1426, %v1755
        %v1757 = vpop.f32.mrb[0].mxu0
        %v1758 = vpop.f32.mrb[0].mxu0
        %v1759 = vadd.f32 %v1426, %v1758
        %v1760 = vpop.f32.mrb[0].mxu0
        %1761 = vmatprep.mubr.bf16.mxu0 0
        %1762 = vmatmul.mubr.bf16.gmra.mrb[0].mxu0 %v1514
        %v1763 = vpop.f32.mrb[0].mxu0
        %v1764 = vadd.f32 %v1426, %v1763
        %v1765 = vpop.f32.mrb[0].mxu0
        %v1766 = vpop.f32.mrb[0].mxu0
        %v1767 = vadd.f32 %v1426, %v1766
        %v1768 = vpop.f32.mrb[0].mxu0
        %1769 = vmatprep.mubr.bf16.mxu0 0
        %1770 = vmatmul.mubr.bf16.gmra.mrb[0].mxu0 %v1517
        %v1771 = vpop.f32.mrb[0].mxu0
        %v1772 = vadd.f32 %v1426, %v1771
        %v1773 = vpop.f32.mrb[0].mxu0
        %v1774 = vpop.f32.mrb[0].mxu0
        %v1775 = vadd.f32 %v1426, %v1774
        %v1776 = vpop.f32.mrb[0].mxu0
        %1777 = vmatprep.mubr.bf16.mxu0 0
        %1778 = vmatmul.mubr.bf16.gmra.mrb[0].mxu0 %v1520
        %v1779 = vpop.f32.mrb[0].mxu0
        %v1780 = vadd.f32 %v1426, %v1779
        %v1781 = vpop.f32.mrb[0].mxu0
        %v1782 = vpop.f32.mrb[0].mxu0
        %v1783 = vadd.f32 %v1426, %v1782
        %v1784 = vpop.f32.mrb[0].mxu0
        %1785 = vmatprep.mubr.bf16.mxu0 0
        %1786 = vmatmul.mubr.bf16.gmra.mrb[0].mxu0 %v1523
        %v1787 = vpop.f32.mrb[0].mxu0
        %v1788 = vadd.f32 %v1426, %v1787
        %v1789 = vpop.f32.mrb[0].mxu0
        %v1790 = vpop.f32.mrb[0].mxu0
        %v1791 = vadd.f32 %v1426, %v1790
        %v1792 = vpop.f32.mrb[0].mxu0
        %1793 = vmatprep.mubr.bf16.mxu0 0
        %1794 = vmatmul.mubr.bf16.gmra.mrb[0].mxu0 %v1526
        %v1795 = vpop.f32.mrb[0].mxu0
        %v1796 = vadd.f32 %v1426, %v1795
        %v1797 = vpop.f32.mrb[0].mxu0
        %v1798 = vpop.f32.mrb[0].mxu0
        %v1799 = vadd.f32 %v1426, %v1798
        %v1800 = vpop.f32.mrb[0].mxu0
        %1801 = vmatprep.mubr.bf16.mxu0 0
        %1802 = vmatmul.mubr.bf16.gmra.mrb[0].mxu0 %v1529
        %v1803 = vpop.f32.mrb[0].mxu0
        %v1804 = vadd.f32 %v1426, %v1803
        %v1805 = vpop.f32.mrb[0].mxu0
        %v1806 = vpop.f32.mrb[0].mxu0
        %v1807 = vadd.f32 %v1426, %v1806
        %v1808 = vpop.f32.mrb[0].mxu0
        %1809 = vmatprep.mubr.bf16.mxu0 0
        %1810 = vmatmul.mubr.bf16.gmra.mrb[0].mxu0 %v1532
        %v1811 = vpop.f32.mrb[0].mxu0
        %v1812 = vadd.f32 %v1426, %v1811
        %v1813 = vpop.f32.mrb[0].mxu0
        %v1814 = vpop.f32.mrb[0].mxu0
        %v1815 = vadd.f32 %v1426, %v1814
        %v1816 = vpop.f32.mrb[0].mxu0
        %1817 = vmatprep.mubr.bf16.mxu0 0
        %1818 = vmatmul.mubr.bf16.gmra.mrb[0].mxu0 %v1535
        %v1819 = vpop.f32.mrb[0].mxu0
        %v1820 = vadd.f32 %v1426, %v1819
        %v1821 = vpop.f32.mrb[0].mxu0
        %v1822 = vpop.f32.mrb[0].mxu0
        %v1823 = vadd.f32 %v1426, %v1822
        %v1824 = vpop.f32.mrb[0].mxu0
        %1825 = vdwg.mxu0
        %v1826 = vpack.c.bf16 %v1575, %v1572
        %v1827 = vpack.c.bf16 %v1583, %v1580
        %v1828 = vpack.c.bf16 %v1591, %v1588
        %v1829 = vpack.c.bf16 %v1599, %v1596
        %v1830 = vpack.c.bf16 %v1607, %v1604
        %v1831 = vpack.c.bf16 %v1615, %v1612
        %v1832 = vpack.c.bf16 %v1623, %v1620
        %v1833 = vpack.c.bf16 %v1631, %v1628
        %v1834 = vpack.c.bf16 %v1639, %v1636
        %v1835 = vpack.c.bf16 %v1647, %v1644
        %v1836 = vpack.c.bf16 %v1655, %v1652
        %v1837 = vpack.c.bf16 %v1663, %v1660
        %v1838 = vpack.c.bf16 %v1671, %v1668
        %v1839 = vpack.c.bf16 %v1679, %v1676
        %v1840 = vpack.c.bf16 %v1687, %v1684
        %v1841 = vpack.c.bf16 %v1695, %v1692
        %v1842 = vpack.c.bf16 %v1703, %v1700
        %v1843 = vpack.c.bf16 %v1711, %v1708
        %v1844 = vpack.c.bf16 %v1719, %v1716
        %v1845 = vpack.c.bf16 %v1727, %v1724
        %v1846 = vpack.c.bf16 %v1735, %v1732
        %v1847 = vpack.c.bf16 %v1743, %v1740
        %v1848 = vpack.c.bf16 %v1751, %v1748
        %v1849 = vpack.c.bf16 %v1759, %v1756
        %v1850 = vpack.c.bf16 %v1767, %v1764
        %v1851 = vpack.c.bf16 %v1775, %v1772
        %v1852 = vpack.c.bf16 %v1783, %v1780
        %v1853 = vpack.c.bf16 %v1791, %v1788
        %v1854 = vpack.c.bf16 %v1799, %v1796
        %v1855 = vpack.c.bf16 %v1807, %v1804
        %v1856 = vpack.c.bf16 %v1815, %v1812
        %v1857 = vpack.c.bf16 %v1823, %v1820
        %v1858 = vmax.bf16 %v1826, 0
        %v1859 = vmax.bf16 %v1827, 0
        %v1860 = vmax.bf16 %v1828, 0
        %v1861 = vmax.bf16 %v1829, 0
        %v1862 = vmax.bf16 %v1830, 0
        %v1863 = vmax.bf16 %v1831, 0
        %v1864 = vmax.bf16 %v1832, 0
        %v1865 = vmax.bf16 %v1833, 0
        %v1866 = vmax.bf16 %v1834, 0
        %v1867 = vmax.bf16 %v1835, 0
        %v1868 = vmax.bf16 %v1836, 0
        %v1869 = vmax.bf16 %v1837, 0
        %v1870 = vmax.bf16 %v1838, 0
        %v1871 = vmax.bf16 %v1839, 0
        %v1872 = vmax.bf16 %v1840, 0
        %v1873 = vmax.bf16 %v1841, 0
        %v1874 = vmax.bf16 %v1842, 0
        %v1875 = vmax.bf16 %v1843, 0
        %v1876 = vmax.bf16 %v1844, 0
        %v1877 = vmax.bf16 %v1845, 0
        %v1878 = vmax.bf16 %v1846, 0
        %v1879 = vmax.bf16 %v1847, 0
        %v1880 = vmax.bf16 %v1848, 0
        %v1881 = vmax.bf16 %v1849, 0
        %v1882 = vmax.bf16 %v1850, 0
        %v1883 = vmax.bf16 %v1851, 0
        %v1884 = vmax.bf16 %v1852, 0
        %v1885 = vmax.bf16 %v1853, 0
        %v1886 = vmax.bf16 %v1854, 0
        %v1887 = vmax.bf16 %v1855, 0
        %v1888 = vmax.bf16 %v1856, 0
        %v1889 = vmax.bf16 %v1857, 0
        %v1890 = vld [vmem:[%s7] sm:$0xf]
        %v1891 = vld [vmem:[%s7 + $0x4] sm:$0xf]
        %v1892 = vld [vmem:[%s7 + $0x8] sm:$0xf]
        %v1893 = vld [vmem:[%s7 + $0xc] sm:$0xf]
        %v1894 = vld [vmem:[%s8] sm:$0x1]
        %v1896 = vlaneseq
        %v1897 = vshrl.u32 %v1896, 7
        %v1898 = vsub.s32 0, %v1897
        %v1899 = vrot.slane %v1894, %v1898
        %v1905 = vunpack.c.l.b16 %v1890
        %v1906 = vunpack.c.l.b16 %v1891
        %v1907 = vunpack.c.l.b16 %v1892
        %v1908 = vunpack.c.l.b16 %v1893
        %v1909 = vpack.c.b16 %v1906, %v1905
        %v1910 = vpack.c.b16 %v1908, %v1907
        %v1914 = vsel %vm1440, %v1858, 0
        %v1917 = vsel %vm1440, %v1859, 0
        %v1920 = vsel %vm1440, %v1860, 0
        %v1923 = vsel %vm1440, %v1861, 0
        %v1926 = vsel %vm1440, %v1862, 0
        %v1929 = vsel %vm1440, %v1863, 0
        %v1932 = vsel %vm1440, %v1864, 0
        %v1935 = vsel %vm1440, %v1865, 0
        %v1938 = vsel %vm1440, %v1866, 0
        %v1941 = vsel %vm1440, %v1867, 0
        %v1944 = vsel %vm1440, %v1868, 0
        %v1947 = vsel %vm1440, %v1869, 0
        %v1950 = vsel %vm1440, %v1870, 0
        %v1953 = vsel %vm1440, %v1871, 0
        %v1956 = vsel %vm1440, %v1872, 0
        %v1959 = vsel %vm1440, %v1873, 0
        %v1962 = vsel %vm1440, %v1874, 0
        %v1965 = vsel %vm1440, %v1875, 0
        %v1968 = vsel %vm1440, %v1876, 0
        %v1971 = vsel %vm1440, %v1877, 0
        %v1974 = vsel %vm1440, %v1878, 0
        %v1977 = vsel %vm1440, %v1879, 0
        %v1980 = vsel %vm1440, %v1880, 0
        %v1983 = vsel %vm1440, %v1881, 0
        %v1986 = vsel %vm1440, %v1882, 0
        %v1989 = vsel %vm1440, %v1883, 0
        %v1992 = vsel %vm1440, %v1884, 0
        %v1995 = vsel %vm1440, %v1885, 0
        %v1998 = vsel %vm1440, %v1886, 0
        %v2001 = vsel %vm1440, %v1887, 0
        %v2004 = vsel %vm1440, %v1888, 0
        %v2007 = vsel %vm1440, %v1889, 0
        %2009 = vmatprep.subr.bf16.mxu0 0
        %2010 = vmatpush1.bf16.msra.mxu0 %v1909
        %2011 = vmatprep.subr.bf16.mxu0 0
        %2012 = vmatpush1.bf16.msra.mxu0 %v1910
        %2013 = vmatprep.subr.bf16.mxu0 0
        %2014 = vmatpush1.bf16.msra.mxu0 0
        %2015 = vmatprep.subr.bf16.mxu0 0
        %2016 = vmatpush1.bf16.msra.mxu0 0
        %2017 = vmatprep.subr.bf16.mxu0 0
        %2018 = vmatpush1.bf16.msra.mxu0 0
        %2019 = vmatprep.subr.bf16.mxu0 0
        %2020 = vmatpush1.bf16.msra.mxu0 0
        %2021 = vmatprep.subr.bf16.mxu0 0
        %2022 = vmatpush1.bf16.msra.mxu0 0
        %2023 = vmatprep.subr.bf16.mxu0 0
        %2024 = vmatpush1.bf16.msra.mxu0 0
        %2025 = vmatprep.subr.bf16.mxu0 0
        %2026 = vmatpush1.bf16.msra.mxu0 0
        %2027 = vmatprep.subr.bf16.mxu0 0
        %2028 = vmatpush1.bf16.msra.mxu0 0
        %2029 = vmatprep.subr.bf16.mxu0 0
        %2030 = vmatpush1.bf16.msra.mxu0 0
        %2031 = vmatprep.subr.bf16.mxu0 0
        %2032 = vmatpush1.bf16.msra.mxu0 0
        %2033 = vmatprep.subr.bf16.mxu0 0
        %2034 = vmatpush1.bf16.msra.mxu0 0
        %2035 = vmatprep.subr.bf16.mxu0 0
        %2036 = vmatpush1.bf16.msra.mxu0 0
        %2037 = vmatprep.subr.bf16.mxu0 0
        %2038 = vmatpush1.bf16.msra.mxu0 0
        %2039 = vmatprep.subr.bf16.mxu0 0
        %2040 = vmatpush1.bf16.msra.mxu0 0
        %2041 = vmatprep.mubr.bf16.mxu0 0
        %2042 = vmatmul.mubr.bf16.gmra.mrb[0].mxu0 %v1914
        %v2043 = vpop.f32.mrb[0].mxu0
        %v2044 = vadd.f32 %v1899, %v2043
        %v2045 = vpop.f32.mrb[0].mxu0
        %v2046 = vpop.f32.mrb[0].mxu0
        %v2047 = vadd.f32 %v1899, %v2046
        %v2048 = vpop.f32.mrb[0].mxu0
        %2049 = vmatprep.mubr.bf16.mxu0 0
        %2050 = vmatmul.mubr.bf16.gmra.mrb[0].mxu0 %v1917
        %v2051 = vpop.f32.mrb[0].mxu0
        %v2052 = vadd.f32 %v1899, %v2051
        %v2053 = vpop.f32.mrb[0].mxu0
        %v2054 = vpop.f32.mrb[0].mxu0
        %v2055 = vadd.f32 %v1899, %v2054
        %v2056 = vpop.f32.mrb[0].mxu0
        %2057 = vmatprep.mubr.bf16.mxu0 0
        %2058 = vmatmul.mubr.bf16.gmra.mrb[0].mxu0 %v1920
        %v2059 = vpop.f32.mrb[0].mxu0
        %v2060 = vadd.f32 %v1899, %v2059
        %v2061 = vpop.f32.mrb[0].mxu0
        %v2062 = vpop.f32.mrb[0].mxu0
        %v2063 = vadd.f32 %v1899, %v2062
        %v2064 = vpop.f32.mrb[0].mxu0
        %2065 = vmatprep.mubr.bf16.mxu0 0
        %2066 = vmatmul.mubr.bf16.gmra.mrb[0].mxu0 %v1923
        %v2067 = vpop.f32.mrb[0].mxu0
        %v2068 = vadd.f32 %v1899, %v2067
        %v2069 = vpop.f32.mrb[0].mxu0
        %v2070 = vpop.f32.mrb[0].mxu0
        %v2071 = vadd.f32 %v1899, %v2070
        %v2072 = vpop.f32.mrb[0].mxu0
        %2073 = vmatprep.mubr.bf16.mxu0 0
        %2074 = vmatmul.mubr.bf16.gmra.mrb[0].mxu0 %v1926
        %v2075 = vpop.f32.mrb[0].mxu0
        %v2076 = vadd.f32 %v1899, %v2075
        %v2077 = vpop.f32.mrb[0].mxu0
        %v2078 = vpop.f32.mrb[0].mxu0
        %v2079 = vadd.f32 %v1899, %v2078
        %v2080 = vpop.f32.mrb[0].mxu0
        %2081 = vmatprep.mubr.bf16.mxu0 0
        %2082 = vmatmul.mubr.bf16.gmra.mrb[0].mxu0 %v1929
        %v2083 = vpop.f32.mrb[0].mxu0
        %v2084 = vadd.f32 %v1899, %v2083
        %v2085 = vpop.f32.mrb[0].mxu0
        %v2086 = vpop.f32.mrb[0].mxu0
        %v2087 = vadd.f32 %v1899, %v2086
        %v2088 = vpop.f32.mrb[0].mxu0
        %2089 = vmatprep.mubr.bf16.mxu0 0
        %2090 = vmatmul.mubr.bf16.gmra.mrb[0].mxu0 %v1932
        %v2091 = vpop.f32.mrb[0].mxu0
        %v2092 = vadd.f32 %v1899, %v2091
        %v2093 = vpop.f32.mrb[0].mxu0
        %v2094 = vpop.f32.mrb[0].mxu0
        %v2095 = vadd.f32 %v1899, %v2094
        %v2096 = vpop.f32.mrb[0].mxu0
        %2097 = vmatprep.mubr.bf16.mxu0 0
        %2098 = vmatmul.mubr.bf16.gmra.mrb[0].mxu0 %v1935
        %v2099 = vpop.f32.mrb[0].mxu0
        %v2100 = vadd.f32 %v1899, %v2099
        %v2101 = vpop.f32.mrb[0].mxu0
        %v2102 = vpop.f32.mrb[0].mxu0
        %v2103 = vadd.f32 %v1899, %v2102
        %v2104 = vpop.f32.mrb[0].mxu0
        %2105 = vmatprep.mubr.bf16.mxu0 0
        %2106 = vmatmul.mubr.bf16.gmra.mrb[0].mxu0 %v1938
        %v2107 = vpop.f32.mrb[0].mxu0
        %v2108 = vadd.f32 %v1899, %v2107
        %v2109 = vpop.f32.mrb[0].mxu0
        %v2110 = vpop.f32.mrb[0].mxu0
        %v2111 = vadd.f32 %v1899, %v2110
        %v2112 = vpop.f32.mrb[0].mxu0
        %2113 = vmatprep.mubr.bf16.mxu0 0
        %2114 = vmatmul.mubr.bf16.gmra.mrb[0].mxu0 %v1941
        %v2115 = vpop.f32.mrb[0].mxu0
        %v2116 = vadd.f32 %v1899, %v2115
        %v2117 = vpop.f32.mrb[0].mxu0
        %v2118 = vpop.f32.mrb[0].mxu0
        %v2119 = vadd.f32 %v1899, %v2118
        %v2120 = vpop.f32.mrb[0].mxu0
        %2121 = vmatprep.mubr.bf16.mxu0 0
        %2122 = vmatmul.mubr.bf16.gmra.mrb[0].mxu0 %v1944
        %v2123 = vpop.f32.mrb[0].mxu0
        %v2124 = vadd.f32 %v1899, %v2123
        %v2125 = vpop.f32.mrb[0].mxu0
        %v2126 = vpop.f32.mrb[0].mxu0
        %v2127 = vadd.f32 %v1899, %v2126
        %v2128 = vpop.f32.mrb[0].mxu0
        %2129 = vmatprep.mubr.bf16.mxu0 0
        %2130 = vmatmul.mubr.bf16.gmra.mrb[0].mxu0 %v1947
        %v2131 = vpop.f32.mrb[0].mxu0
        %v2132 = vadd.f32 %v1899, %v2131
        %v2133 = vpop.f32.mrb[0].mxu0
        %v2134 = vpop.f32.mrb[0].mxu0
        %v2135 = vadd.f32 %v1899, %v2134
        %v2136 = vpop.f32.mrb[0].mxu0
        %2137 = vmatprep.mubr.bf16.mxu0 0
        %2138 = vmatmul.mubr.bf16.gmra.mrb[0].mxu0 %v1950
        %v2139 = vpop.f32.mrb[0].mxu0
        %v2140 = vadd.f32 %v1899, %v2139
        %v2141 = vpop.f32.mrb[0].mxu0
        %v2142 = vpop.f32.mrb[0].mxu0
        %v2143 = vadd.f32 %v1899, %v2142
        %v2144 = vpop.f32.mrb[0].mxu0
        %2145 = vmatprep.mubr.bf16.mxu0 0
        %2146 = vmatmul.mubr.bf16.gmra.mrb[0].mxu0 %v1953
        %v2147 = vpop.f32.mrb[0].mxu0
        %v2148 = vadd.f32 %v1899, %v2147
        %v2149 = vpop.f32.mrb[0].mxu0
        %v2150 = vpop.f32.mrb[0].mxu0
        %v2151 = vadd.f32 %v1899, %v2150
        %v2152 = vpop.f32.mrb[0].mxu0
        %2153 = vmatprep.mubr.bf16.mxu0 0
        %2154 = vmatmul.mubr.bf16.gmra.mrb[0].mxu0 %v1956
        %v2155 = vpop.f32.mrb[0].mxu0
        %v2156 = vadd.f32 %v1899, %v2155
        %v2157 = vpop.f32.mrb[0].mxu0
        %v2158 = vpop.f32.mrb[0].mxu0
        %v2159 = vadd.f32 %v1899, %v2158
        %v2160 = vpop.f32.mrb[0].mxu0
        %2161 = vmatprep.mubr.bf16.mxu0 0
        %2162 = vmatmul.mubr.bf16.gmra.mrb[0].mxu0 %v1959
        %v2163 = vpop.f32.mrb[0].mxu0
        %v2164 = vadd.f32 %v1899, %v2163
        %v2165 = vpop.f32.mrb[0].mxu0
        %v2166 = vpop.f32.mrb[0].mxu0
        %v2167 = vadd.f32 %v1899, %v2166
        %v2168 = vpop.f32.mrb[0].mxu0
        %2169 = vmatprep.mubr.bf16.mxu0 0
        %2170 = vmatmul.mubr.bf16.gmra.mrb[0].mxu0 %v1962
        %v2171 = vpop.f32.mrb[0].mxu0
        %v2172 = vadd.f32 %v1899, %v2171
        %v2173 = vpop.f32.mrb[0].mxu0
        %v2174 = vpop.f32.mrb[0].mxu0
        %v2175 = vadd.f32 %v1899, %v2174
        %v2176 = vpop.f32.mrb[0].mxu0
        %2177 = vmatprep.mubr.bf16.mxu0 0
        %2178 = vmatmul.mubr.bf16.gmra.mrb[0].mxu0 %v1965
        %v2179 = vpop.f32.mrb[0].mxu0
        %v2180 = vadd.f32 %v1899, %v2179
        %v2181 = vpop.f32.mrb[0].mxu0
        %v2182 = vpop.f32.mrb[0].mxu0
        %v2183 = vadd.f32 %v1899, %v2182
        %v2184 = vpop.f32.mrb[0].mxu0
        %2185 = vmatprep.mubr.bf16.mxu0 0
        %2186 = vmatmul.mubr.bf16.gmra.mrb[0].mxu0 %v1968
        %v2187 = vpop.f32.mrb[0].mxu0
        %v2188 = vadd.f32 %v1899, %v2187
        %v2189 = vpop.f32.mrb[0].mxu0
        %v2190 = vpop.f32.mrb[0].mxu0
        %v2191 = vadd.f32 %v1899, %v2190
        %v2192 = vpop.f32.mrb[0].mxu0
        %2193 = vmatprep.mubr.bf16.mxu0 0
        %2194 = vmatmul.mubr.bf16.gmra.mrb[0].mxu0 %v1971
        %v2195 = vpop.f32.mrb[0].mxu0
        %v2196 = vadd.f32 %v1899, %v2195
        %v2197 = vpop.f32.mrb[0].mxu0
        %v2198 = vpop.f32.mrb[0].mxu0
        %v2199 = vadd.f32 %v1899, %v2198
        %v2200 = vpop.f32.mrb[0].mxu0
        %2201 = vmatprep.mubr.bf16.mxu0 0
        %2202 = vmatmul.mubr.bf16.gmra.mrb[0].mxu0 %v1974
        %v2203 = vpop.f32.mrb[0].mxu0
        %v2204 = vadd.f32 %v1899, %v2203
        %v2205 = vpop.f32.mrb[0].mxu0
        %v2206 = vpop.f32.mrb[0].mxu0
        %v2207 = vadd.f32 %v1899, %v2206
        %v2208 = vpop.f32.mrb[0].mxu0
        %2209 = vmatprep.mubr.bf16.mxu0 0
        %2210 = vmatmul.mubr.bf16.gmra.mrb[0].mxu0 %v1977
        %v2211 = vpop.f32.mrb[0].mxu0
        %v2212 = vadd.f32 %v1899, %v2211
        %v2213 = vpop.f32.mrb[0].mxu0
        %v2214 = vpop.f32.mrb[0].mxu0
        %v2215 = vadd.f32 %v1899, %v2214
        %v2216 = vpop.f32.mrb[0].mxu0
        %2217 = vmatprep.mubr.bf16.mxu0 0
        %2218 = vmatmul.mubr.bf16.gmra.mrb[0].mxu0 %v1980
        %v2219 = vpop.f32.mrb[0].mxu0
        %v2220 = vadd.f32 %v1899, %v2219
        %v2221 = vpop.f32.mrb[0].mxu0
        %v2222 = vpop.f32.mrb[0].mxu0
        %v2223 = vadd.f32 %v1899, %v2222
        %v2224 = vpop.f32.mrb[0].mxu0
        %2225 = vmatprep.mubr.bf16.mxu0 0
        %2226 = vmatmul.mubr.bf16.gmra.mrb[0].mxu0 %v1983
        %v2227 = vpop.f32.mrb[0].mxu0
        %v2228 = vadd.f32 %v1899, %v2227
        %v2229 = vpop.f32.mrb[0].mxu0
        %v2230 = vpop.f32.mrb[0].mxu0
        %v2231 = vadd.f32 %v1899, %v2230
        %v2232 = vpop.f32.mrb[0].mxu0
        %2233 = vmatprep.mubr.bf16.mxu0 0
        %2234 = vmatmul.mubr.bf16.gmra.mrb[0].mxu0 %v1986
        %v2235 = vpop.f32.mrb[0].mxu0
        %v2236 = vadd.f32 %v1899, %v2235
        %v2237 = vpop.f32.mrb[0].mxu0
        %v2238 = vpop.f32.mrb[0].mxu0
        %v2239 = vadd.f32 %v1899, %v2238
        %v2240 = vpop.f32.mrb[0].mxu0
        %2241 = vmatprep.mubr.bf16.mxu0 0
        %2242 = vmatmul.mubr.bf16.gmra.mrb[0].mxu0 %v1989
        %v2243 = vpop.f32.mrb[0].mxu0
        %v2244 = vadd.f32 %v1899, %v2243
        %v2245 = vpop.f32.mrb[0].mxu0
        %v2246 = vpop.f32.mrb[0].mxu0
        %v2247 = vadd.f32 %v1899, %v2246
        %v2248 = vpop.f32.mrb[0].mxu0
        %2249 = vmatprep.mubr.bf16.mxu0 0
        %2250 = vmatmul.mubr.bf16.gmra.mrb[0].mxu0 %v1992
        %v2251 = vpop.f32.mrb[0].mxu0
        %v2252 = vadd.f32 %v1899, %v2251
        %v2253 = vpop.f32.mrb[0].mxu0
        %v2254 = vpop.f32.mrb[0].mxu0
        %v2255 = vadd.f32 %v1899, %v2254
        %v2256 = vpop.f32.mrb[0].mxu0
        %2257 = vmatprep.mubr.bf16.mxu0 0
        %2258 = vmatmul.mubr.bf16.gmra.mrb[0].mxu0 %v1995
        %v2259 = vpop.f32.mrb[0].mxu0
        %v2260 = vadd.f32 %v1899, %v2259
        %v2261 = vpop.f32.mrb[0].mxu0
        %v2262 = vpop.f32.mrb[0].mxu0
        %v2263 = vadd.f32 %v1899, %v2262
        %v2264 = vpop.f32.mrb[0].mxu0
        %2265 = vmatprep.mubr.bf16.mxu0 0
        %2266 = vmatmul.mubr.bf16.gmra.mrb[0].mxu0 %v1998
        %v2267 = vpop.f32.mrb[0].mxu0
        %v2268 = vadd.f32 %v1899, %v2267
        %v2269 = vpop.f32.mrb[0].mxu0
        %v2270 = vpop.f32.mrb[0].mxu0
        %v2271 = vadd.f32 %v1899, %v2270
        %v2272 = vpop.f32.mrb[0].mxu0
        %2273 = vmatprep.mubr.bf16.mxu0 0
        %2274 = vmatmul.mubr.bf16.gmra.mrb[0].mxu0 %v2001
        %v2275 = vpop.f32.mrb[0].mxu0
        %v2276 = vadd.f32 %v1899, %v2275
        %v2277 = vpop.f32.mrb[0].mxu0
        %v2278 = vpop.f32.mrb[0].mxu0
        %v2279 = vadd.f32 %v1899, %v2278
        %v2280 = vpop.f32.mrb[0].mxu0
        %2281 = vmatprep.mubr.bf16.mxu0 0
        %2282 = vmatmul.mubr.bf16.gmra.mrb[0].mxu0 %v2004
        %v2283 = vpop.f32.mrb[0].mxu0
        %v2284 = vadd.f32 %v1899, %v2283
        %v2285 = vpop.f32.mrb[0].mxu0
        %v2286 = vpop.f32.mrb[0].mxu0
        %v2287 = vadd.f32 %v1899, %v2286
        %v2288 = vpop.f32.mrb[0].mxu0
        %2289 = vmatprep.mubr.bf16.mxu0 0
        %2290 = vmatmul.mubr.bf16.gmra.mrb[0].mxu0 %v2007
        %v2291 = vpop.f32.mrb[0].mxu0
        %v2292 = vadd.f32 %v1899, %v2291
        %v2293 = vpop.f32.mrb[0].mxu0
        %v2294 = vpop.f32.mrb[0].mxu0
        %v2295 = vadd.f32 %v1899, %v2294
        %v2296 = vpop.f32.mrb[0].mxu0
        %2297 = vdwg.mxu0
        %v2298 = vmax.f32 %v2044, 0.0
        %v2299 = vmax.f32 %v2047, 0.0
        %v2300 = vmax.f32 %v2052, 0.0
        %v2301 = vmax.f32 %v2055, 0.0
        %v2302 = vmax.f32 %v2060, 0.0
        %v2303 = vmax.f32 %v2063, 0.0
        %v2304 = vmax.f32 %v2068, 0.0
        %v2305 = vmax.f32 %v2071, 0.0
        %v2306 = vmax.f32 %v2076, 0.0
        %v2307 = vmax.f32 %v2079, 0.0
        %v2308 = vmax.f32 %v2084, 0.0
        %v2309 = vmax.f32 %v2087, 0.0
        %v2310 = vmax.f32 %v2092, 0.0
        %v2311 = vmax.f32 %v2095, 0.0
        %v2312 = vmax.f32 %v2100, 0.0
        %v2313 = vmax.f32 %v2103, 0.0
        %v2314 = vmax.f32 %v2108, 0.0
        %v2315 = vmax.f32 %v2111, 0.0
        %v2316 = vmax.f32 %v2116, 0.0
        %v2317 = vmax.f32 %v2119, 0.0
        %v2318 = vmax.f32 %v2124, 0.0
        %v2319 = vmax.f32 %v2127, 0.0
        %v2320 = vmax.f32 %v2132, 0.0
        %v2321 = vmax.f32 %v2135, 0.0
        %v2322 = vmax.f32 %v2140, 0.0
        %v2323 = vmax.f32 %v2143, 0.0
        %v2324 = vmax.f32 %v2148, 0.0
        %v2325 = vmax.f32 %v2151, 0.0
        %v2326 = vmax.f32 %v2156, 0.0
        %v2327 = vmax.f32 %v2159, 0.0
        %v2328 = vmax.f32 %v2164, 0.0
        %v2329 = vmax.f32 %v2167, 0.0
        %v2330 = vmax.f32 %v2172, 0.0
        %v2331 = vmax.f32 %v2175, 0.0
        %v2332 = vmax.f32 %v2180, 0.0
        %v2333 = vmax.f32 %v2183, 0.0
        %v2334 = vmax.f32 %v2188, 0.0
        %v2335 = vmax.f32 %v2191, 0.0
        %v2336 = vmax.f32 %v2196, 0.0
        %v2337 = vmax.f32 %v2199, 0.0
        %v2338 = vmax.f32 %v2204, 0.0
        %v2339 = vmax.f32 %v2207, 0.0
        %v2340 = vmax.f32 %v2212, 0.0
        %v2341 = vmax.f32 %v2215, 0.0
        %v2342 = vmax.f32 %v2220, 0.0
        %v2343 = vmax.f32 %v2223, 0.0
        %v2344 = vmax.f32 %v2228, 0.0
        %v2345 = vmax.f32 %v2231, 0.0
        %v2346 = vmax.f32 %v2236, 0.0
        %v2347 = vmax.f32 %v2239, 0.0
        %v2348 = vmax.f32 %v2244, 0.0
        %v2349 = vmax.f32 %v2247, 0.0
        %v2350 = vmax.f32 %v2252, 0.0
        %v2351 = vmax.f32 %v2255, 0.0
        %v2352 = vmax.f32 %v2260, 0.0
        %v2353 = vmax.f32 %v2263, 0.0
        %v2354 = vmax.f32 %v2268, 0.0
        %v2355 = vmax.f32 %v2271, 0.0
        %v2356 = vmax.f32 %v2276, 0.0
        %v2357 = vmax.f32 %v2279, 0.0
        %v2358 = vmax.f32 %v2284, 0.0
        %v2359 = vmax.f32 %v2287, 0.0
        %v2360 = vmax.f32 %v2292, 0.0
        %v2361 = vmax.f32 %v2295, 0.0
        %v2362 = vsel %vm1440, %v2298, 0.0
        %v2363 = vsel %vm1440, %v2299, 0.0
        %v2364 = vadd.f32 %v2362, %v2363
        %v2365 = vsel %vm1440, %v2300, 0.0
        %v2366 = vadd.f32 %v2364, %v2365
        %v2367 = vsel %vm1440, %v2301, 0.0
        %v2368 = vadd.f32 %v2366, %v2367
        %v2369 = vsel %vm1440, %v2302, 0.0
        %v2370 = vadd.f32 %v2368, %v2369
        %v2371 = vsel %vm1440, %v2303, 0.0
        %v2372 = vadd.f32 %v2370, %v2371
        %v2373 = vsel %vm1440, %v2304, 0.0
        %v2374 = vadd.f32 %v2372, %v2373
        %v2375 = vsel %vm1440, %v2305, 0.0
        %v2376 = vadd.f32 %v2374, %v2375
        %v2377 = vrot.slane %v2376, 4
        %v2378 = vadd.f32 %v2376, %v2377
        %v2379 = vrot.slane %v2378, 2
        %v2380 = vadd.f32 %v2378, %v2379
        %v2381 = vrot.slane %v2380, 1
        %v2382 = vadd.f32 %v2380, %v2381
        %v2383 = vsel %vm1440, %v2306, 0.0
        %v2384 = vsel %vm1440, %v2307, 0.0
        %v2385 = vadd.f32 %v2383, %v2384
        %v2386 = vsel %vm1440, %v2308, 0.0
        %v2387 = vadd.f32 %v2385, %v2386
        %v2388 = vsel %vm1440, %v2309, 0.0
        %v2389 = vadd.f32 %v2387, %v2388
        %v2390 = vsel %vm1440, %v2310, 0.0
        %v2391 = vadd.f32 %v2389, %v2390
        %v2392 = vsel %vm1440, %v2311, 0.0
        %v2393 = vadd.f32 %v2391, %v2392
        %v2394 = vsel %vm1440, %v2312, 0.0
        %v2395 = vadd.f32 %v2393, %v2394
        %v2396 = vsel %vm1440, %v2313, 0.0
        %v2397 = vadd.f32 %v2395, %v2396
        %v2398 = vrot.slane %v2397, 4
        %v2399 = vadd.f32 %v2397, %v2398
        %v2400 = vrot.slane %v2399, 2
        %v2401 = vadd.f32 %v2399, %v2400
        %v2402 = vrot.slane %v2401, 1
        %v2403 = vadd.f32 %v2401, %v2402
        %v2404 = vsel %vm1440, %v2314, 0.0
        %v2405 = vsel %vm1440, %v2315, 0.0
        %v2406 = vadd.f32 %v2404, %v2405
        %v2407 = vsel %vm1440, %v2316, 0.0
        %v2408 = vadd.f32 %v2406, %v2407
        %v2409 = vsel %vm1440, %v2317, 0.0
        %v2410 = vadd.f32 %v2408, %v2409
        %v2411 = vsel %vm1440, %v2318, 0.0
        %v2412 = vadd.f32 %v2410, %v2411
        %v2413 = vsel %vm1440, %v2319, 0.0
        %v2414 = vadd.f32 %v2412, %v2413
        %v2415 = vsel %vm1440, %v2320, 0.0
        %v2416 = vadd.f32 %v2414, %v2415
        %v2417 = vsel %vm1440, %v2321, 0.0
        %v2418 = vadd.f32 %v2416, %v2417
        %v2419 = vrot.slane %v2418, 4
        %v2420 = vadd.f32 %v2418, %v2419
        %v2421 = vrot.slane %v2420, 2
        %v2422 = vadd.f32 %v2420, %v2421
        %v2423 = vrot.slane %v2422, 1
        %v2424 = vadd.f32 %v2422, %v2423
        %v2425 = vsel %vm1440, %v2322, 0.0
        %v2426 = vsel %vm1440, %v2323, 0.0
        %v2427 = vadd.f32 %v2425, %v2426
        %v2428 = vsel %vm1440, %v2324, 0.0
        %v2429 = vadd.f32 %v2427, %v2428
        %v2430 = vsel %vm1440, %v2325, 0.0
        %v2431 = vadd.f32 %v2429, %v2430
        %v2432 = vsel %vm1440, %v2326, 0.0
        %v2433 = vadd.f32 %v2431, %v2432
        %v2434 = vsel %vm1440, %v2327, 0.0
        %v2435 = vadd.f32 %v2433, %v2434
        %v2436 = vsel %vm1440, %v2328, 0.0
        %v2437 = vadd.f32 %v2435, %v2436
        %v2438 = vsel %vm1440, %v2329, 0.0
        %v2439 = vadd.f32 %v2437, %v2438
        %v2440 = vrot.slane %v2439, 4
        %v2441 = vadd.f32 %v2439, %v2440
        %v2442 = vrot.slane %v2441, 2
        %v2443 = vadd.f32 %v2441, %v2442
        %v2444 = vrot.slane %v2443, 1
        %v2445 = vadd.f32 %v2443, %v2444
        %v2446 = vsel %vm1440, %v2330, 0.0
        %v2447 = vsel %vm1440, %v2331, 0.0
        %v2448 = vadd.f32 %v2446, %v2447
        %v2449 = vsel %vm1440, %v2332, 0.0
        %v2450 = vadd.f32 %v2448, %v2449
        %v2451 = vsel %vm1440, %v2333, 0.0
        %v2452 = vadd.f32 %v2450, %v2451
        %v2453 = vsel %vm1440, %v2334, 0.0
        %v2454 = vadd.f32 %v2452, %v2453
        %v2455 = vsel %vm1440, %v2335, 0.0
        %v2456 = vadd.f32 %v2454, %v2455
        %v2457 = vsel %vm1440, %v2336, 0.0
        %v2458 = vadd.f32 %v2456, %v2457
        %v2459 = vsel %vm1440, %v2337, 0.0
        %v2460 = vadd.f32 %v2458, %v2459
        %v2461 = vrot.slane %v2460, 4
        %v2462 = vadd.f32 %v2460, %v2461
        %v2463 = vrot.slane %v2462, 2
        %v2464 = vadd.f32 %v2462, %v2463
        %v2465 = vrot.slane %v2464, 1
        %v2466 = vadd.f32 %v2464, %v2465
        %v2467 = vsel %vm1440, %v2338, 0.0
        %v2468 = vsel %vm1440, %v2339, 0.0
        %v2469 = vadd.f32 %v2467, %v2468
        %v2470 = vsel %vm1440, %v2340, 0.0
        %v2471 = vadd.f32 %v2469, %v2470
        %v2472 = vsel %vm1440, %v2341, 0.0
        %v2473 = vadd.f32 %v2471, %v2472
        %v2474 = vsel %vm1440, %v2342, 0.0
        %v2475 = vadd.f32 %v2473, %v2474
        %v2476 = vsel %vm1440, %v2343, 0.0
        %v2477 = vadd.f32 %v2475, %v2476
        %v2478 = vsel %vm1440, %v2344, 0.0
        %v2479 = vadd.f32 %v2477, %v2478
        %v2480 = vsel %vm1440, %v2345, 0.0
        %v2481 = vadd.f32 %v2479, %v2480
        %v2482 = vrot.slane %v2481, 4
        %v2483 = vadd.f32 %v2481, %v2482
        %v2484 = vrot.slane %v2483, 2
        %v2485 = vadd.f32 %v2483, %v2484
        %v2486 = vrot.slane %v2485, 1
        %v2487 = vadd.f32 %v2485, %v2486
        %v2488 = vsel %vm1440, %v2346, 0.0
        %v2489 = vsel %vm1440, %v2347, 0.0
        %v2490 = vadd.f32 %v2488, %v2489
        %v2491 = vsel %vm1440, %v2348, 0.0
        %v2492 = vadd.f32 %v2490, %v2491
        %v2493 = vsel %vm1440, %v2349, 0.0
        %v2494 = vadd.f32 %v2492, %v2493
        %v2495 = vsel %vm1440, %v2350, 0.0
        %v2496 = vadd.f32 %v2494, %v2495
        %v2497 = vsel %vm1440, %v2351, 0.0
        %v2498 = vadd.f32 %v2496, %v2497
        %v2499 = vsel %vm1440, %v2352, 0.0
        %v2500 = vadd.f32 %v2498, %v2499
        %v2501 = vsel %vm1440, %v2353, 0.0
        %v2502 = vadd.f32 %v2500, %v2501
        %v2503 = vrot.slane %v2502, 4
        %v2504 = vadd.f32 %v2502, %v2503
        %v2505 = vrot.slane %v2504, 2
        %v2506 = vadd.f32 %v2504, %v2505
        %v2507 = vrot.slane %v2506, 1
        %v2508 = vadd.f32 %v2506, %v2507
        %v2509 = vsel %vm1440, %v2354, 0.0
        %v2510 = vsel %vm1440, %v2355, 0.0
        %v2511 = vadd.f32 %v2509, %v2510
        %v2512 = vsel %vm1440, %v2356, 0.0
        %v2513 = vadd.f32 %v2511, %v2512
        %v2514 = vsel %vm1440, %v2357, 0.0
        %v2515 = vadd.f32 %v2513, %v2514
        %v2516 = vsel %vm1440, %v2358, 0.0
        %v2517 = vadd.f32 %v2515, %v2516
        %v2518 = vsel %vm1440, %v2359, 0.0
        %v2519 = vadd.f32 %v2517, %v2518
        %v2520 = vsel %vm1440, %v2360, 0.0
        %v2521 = vadd.f32 %v2519, %v2520
        %v2522 = vsel %vm1440, %v2361, 0.0
        %v2523 = vadd.f32 %v2521, %v2522
        %v2524 = vrot.slane %v2523, 4
        %v2525 = vadd.f32 %v2523, %v2524
        %v2526 = vrot.slane %v2525, 2
        %v2527 = vadd.f32 %v2525, %v2526
        %v2528 = vrot.slane %v2527, 1
        %v2529 = vadd.f32 %v2527, %v2528
        %v2530 = vpack.c.bf16 %v2382, %v2382
        %v2531 = vpack.c.bf16 %v2403, %v2403
        %v2532 = vpack.c.bf16 %v2424, %v2424
        %v2533 = vpack.c.bf16 %v2445, %v2445
        %v2534 = vpack.c.bf16 %v2466, %v2466
        %v2535 = vpack.c.bf16 %v2487, %v2487
        %v2536 = vpack.c.bf16 %v2508, %v2508
        %v2537 = vpack.c.bf16 %v2529, %v2529
        %v2538 = vld [vmem:[%s9] sm:$0xf]
        %v2539 = vld [vmem:[%s9 + $0x4] sm:$0xf]
        %v2540 = vld [vmem:[%s9 + $0x8] sm:$0xf]
        %v2541 = vld [vmem:[%s9 + $0xc] sm:$0xf]
        %v2542 = vld [vmem:[%s10] sm:$0x1]
        %v2544 = vlaneseq
        %v2545 = vshrl.u32 %v2544, 7
        %v2546 = vsub.s32 0, %v2545
        %v2547 = vrot.slane %v2542, %v2546
        %v2557 = vunpack.c.l.b16 %v2530
        %v2558 = vunpack.c.l.b16 %v2531
        %v2559 = vunpack.c.l.b16 %v2532
        %v2560 = vunpack.c.l.b16 %v2533
        %v2561 = vunpack.c.l.b16 %v2534
        %v2562 = vunpack.c.l.b16 %v2535
        %v2563 = vunpack.c.l.b16 %v2536
        %v2564 = vunpack.c.l.b16 %v2537
        %vm2565 = vcmask 1041409
        %v2566 = vsel %vm2565, %v2558, %v2557
        %vm2567 = vcmask 1042434
        %v2568 = vsel %vm2567, %v2559, %v2566
        %vm2569 = vcmask 1043459
        %v2570 = vsel %vm2569, %v2560, %v2568
        %vm2571 = vcmask 1044484
        %v2572 = vsel %vm2571, %v2561, %v2570
        %vm2573 = vcmask 1045509
        %v2574 = vsel %vm2573, %v2562, %v2572
        %vm2575 = vcmask 1046534
        %v2576 = vsel %vm2575, %v2563, %v2574
        %vm2577 = vcmask 1047559
        %v2578 = vsel %vm2577, %v2564, %v2576
        %v2579 = vpack.c.b16 %v2578, %v2578
        %v2584 = vunpack.c.l.b16 %v2538
        %v2585 = vunpack.c.l.b16 %v2539
        %v2586 = vunpack.c.l.b16 %v2540
        %v2587 = vunpack.c.l.b16 %v2541
        %v2588 = vpack.c.b16 %v2585, %v2584
        %v2589 = vpack.c.b16 %v2587, %v2586
        %v2593 = vsel %vm1440, %v2579, 0
        %2595 = vmatprep.subr.bf16.mxu0 0
        %2596 = vmatpush1.bf16.msra.mxu0 %v2588
        %2597 = vmatprep.subr.bf16.mxu0 0
        %2598 = vmatpush1.bf16.msra.mxu0 %v2589
        %2599 = vmatprep.subr.bf16.mxu0 0
        %2600 = vmatpush1.bf16.msra.mxu0 0
        %2601 = vmatprep.subr.bf16.mxu0 0
        %2602 = vmatpush1.bf16.msra.mxu0 0
        %2603 = vmatprep.subr.bf16.mxu0 0
        %2604 = vmatpush1.bf16.msra.mxu0 0
        %2605 = vmatprep.subr.bf16.mxu0 0
        %2606 = vmatpush1.bf16.msra.mxu0 0
        %2607 = vmatprep.subr.bf16.mxu0 0
        %2608 = vmatpush1.bf16.msra.mxu0 0
        %2609 = vmatprep.subr.bf16.mxu0 0
        %2610 = vmatpush1.bf16.msra.mxu0 0
        %2611 = vmatprep.subr.bf16.mxu0 0
        %2612 = vmatpush1.bf16.msra.mxu0 0
        %2613 = vmatprep.subr.bf16.mxu0 0
        %2614 = vmatpush1.bf16.msra.mxu0 0
        %2615 = vmatprep.subr.bf16.mxu0 0
        %2616 = vmatpush1.bf16.msra.mxu0 0
        %2617 = vmatprep.subr.bf16.mxu0 0
        %2618 = vmatpush1.bf16.msra.mxu0 0
        %2619 = vmatprep.subr.bf16.mxu0 0
        %2620 = vmatpush1.bf16.msra.mxu0 0
        %2621 = vmatprep.subr.bf16.mxu0 0
        %2622 = vmatpush1.bf16.msra.mxu0 0
        %2623 = vmatprep.subr.bf16.mxu0 0
        %2624 = vmatpush1.bf16.msra.mxu0 0
        %2625 = vmatprep.subr.bf16.mxu0 0
        %2626 = vmatpush1.bf16.msra.mxu0 0
        %2627 = vmatprep.mubr.bf16.mxu0 0
        %2628 = vmatmul.mubr.bf16.gmra.mrb[0].mxu0 %v2593
        %v2629 = vpop.f32.mrb[0].mxu0
        %v2630 = vadd.f32 %v2547, %v2629
        %v2631 = vpop.f32.mrb[0].mxu0
        %v2632 = vpop.f32.mrb[0].mxu0
        %v2633 = vpop.f32.mrb[0].mxu0
        %2634 = vdwg.mxu0
        %v2635 = vpack.c.bf16 %v2630, %v2630
        %v2636 = vmax.bf16 %v2635, 0
        %v2637 = vld [vmem:[%s11] sm:$0xf]
        %v2638 = vld [vmem:[%s11 + $0x4] sm:$0xf]
        %v2639 = vld [vmem:[%s11 + $0x8] sm:$0xf]
        %v2640 = vld [vmem:[%s11 + $0xc] sm:$0xf]
        %v2641 = vld [vmem:[%s12] sm:$0x1]
        %v2643 = vlaneseq
        %v2644 = vshrl.u32 %v2643, 7
        %v2645 = vsub.s32 0, %v2644
        %v2646 = vrot.slane %v2641, %v2645
        %v2652 = vunpack.c.l.b16 %v2637
        %v2653 = vunpack.c.l.b16 %v2638
        %v2654 = vunpack.c.l.b16 %v2639
        %v2655 = vunpack.c.l.b16 %v2640
        %v2656 = vpack.c.b16 %v2653, %v2652
        %v2657 = vpack.c.b16 %v2655, %v2654
        %v2661 = vsel %vm1440, %v2636, 0
        %2663 = vmatprep.subr.bf16.mxu0 0
        %2664 = vmatpush1.bf16.msra.mxu0 %v2656
        %2665 = vmatprep.subr.bf16.mxu0 0
        %2666 = vmatpush1.bf16.msra.mxu0 %v2657
        %2667 = vmatprep.subr.bf16.mxu0 0
        %2668 = vmatpush1.bf16.msra.mxu0 0
        %2669 = vmatprep.subr.bf16.mxu0 0
        %2670 = vmatpush1.bf16.msra.mxu0 0
        %2671 = vmatprep.subr.bf16.mxu0 0
        %2672 = vmatpush1.bf16.msra.mxu0 0
        %2673 = vmatprep.subr.bf16.mxu0 0
        %2674 = vmatpush1.bf16.msra.mxu0 0
        %2675 = vmatprep.subr.bf16.mxu0 0
        %2676 = vmatpush1.bf16.msra.mxu0 0
        %2677 = vmatprep.subr.bf16.mxu0 0
        %2678 = vmatpush1.bf16.msra.mxu0 0
        %2679 = vmatprep.subr.bf16.mxu0 0
        %2680 = vmatpush1.bf16.msra.mxu0 0
        %2681 = vmatprep.subr.bf16.mxu0 0
        %2682 = vmatpush1.bf16.msra.mxu0 0
        %2683 = vmatprep.subr.bf16.mxu0 0
        %2684 = vmatpush1.bf16.msra.mxu0 0
        %2685 = vmatprep.subr.bf16.mxu0 0
        %2686 = vmatpush1.bf16.msra.mxu0 0
        %2687 = vmatprep.subr.bf16.mxu0 0
        %2688 = vmatpush1.bf16.msra.mxu0 0
        %2689 = vmatprep.subr.bf16.mxu0 0
        %2690 = vmatpush1.bf16.msra.mxu0 0
        %2691 = vmatprep.subr.bf16.mxu0 0
        %2692 = vmatpush1.bf16.msra.mxu0 0
        %2693 = vmatprep.subr.bf16.mxu0 0
        %2694 = vmatpush1.bf16.msra.mxu0 0
        %2695 = vmatprep.mubr.bf16.mxu0 0
        %2696 = vmatmul.mubr.bf16.gmra.mrb[0].mxu0 %v2661
        %v2697 = vpop.f32.mrb[0].mxu0
        %v2698 = vadd.f32 %v2646, %v2697
        %v2699 = vpop.f32.mrb[0].mxu0
        %v2700 = vpop.f32.mrb[0].mxu0
        %v2701 = vpop.f32.mrb[0].mxu0
        %2702 = vdwg.mxu0
        %v2703 = vpack.c.bf16 %v2698, %v2698
        %v2704 = vmax.bf16 %v2703, 0
        %v2705 = vld [vmem:[%s13] sm:$0xf]
        %v2706 = vld [vmem:[%s13 + $0x4] sm:$0xf]
        %v2707 = vld [vmem:[%s13 + $0x8] sm:$0xf]
        %v2708 = vld [vmem:[%s13 + $0xc] sm:$0xf]
        %v2709 = vld [vmem:[%s14] sm:$0x1]
        %v2711 = vlaneseq
        %v2712 = vshrl.u32 %v2711, 7
        %v2713 = vsub.s32 0, %v2712
        %v2714 = vrot.slane %v2709, %v2713
        %v2720 = vunpack.c.l.b16 %v2705
        %v2721 = vunpack.c.l.b16 %v2706
        %v2722 = vunpack.c.l.b16 %v2707
        %v2723 = vunpack.c.l.b16 %v2708
        %v2724 = vpack.c.b16 %v2721, %v2720
        %v2725 = vpack.c.b16 %v2723, %v2722
        %v2729 = vsel %vm1440, %v2704, 0
        %2731 = vmatprep.subr.bf16.mxu0 0
        %2732 = vmatpush1.bf16.msra.mxu0 %v2724
        %2733 = vmatprep.subr.bf16.mxu0 0
        %2734 = vmatpush1.bf16.msra.mxu0 %v2725
        %2735 = vmatprep.subr.bf16.mxu0 0
        %2736 = vmatpush1.bf16.msra.mxu0 0
        %2737 = vmatprep.subr.bf16.mxu0 0
        %2738 = vmatpush1.bf16.msra.mxu0 0
        %2739 = vmatprep.subr.bf16.mxu0 0
        %2740 = vmatpush1.bf16.msra.mxu0 0
        %2741 = vmatprep.subr.bf16.mxu0 0
        %2742 = vmatpush1.bf16.msra.mxu0 0
        %2743 = vmatprep.subr.bf16.mxu0 0
        %2744 = vmatpush1.bf16.msra.mxu0 0
        %2745 = vmatprep.subr.bf16.mxu0 0
        %2746 = vmatpush1.bf16.msra.mxu0 0
        %2747 = vmatprep.subr.bf16.mxu0 0
        %2748 = vmatpush1.bf16.msra.mxu0 0
        %2749 = vmatprep.subr.bf16.mxu0 0
        %2750 = vmatpush1.bf16.msra.mxu0 0
        %2751 = vmatprep.subr.bf16.mxu0 0
        %2752 = vmatpush1.bf16.msra.mxu0 0
        %2753 = vmatprep.subr.bf16.mxu0 0
        %2754 = vmatpush1.bf16.msra.mxu0 0
        %2755 = vmatprep.subr.bf16.mxu0 0
        %2756 = vmatpush1.bf16.msra.mxu0 0
        %2757 = vmatprep.subr.bf16.mxu0 0
        %2758 = vmatpush1.bf16.msra.mxu0 0
        %2759 = vmatprep.subr.bf16.mxu0 0
        %2760 = vmatpush1.bf16.msra.mxu0 0
        %2761 = vmatprep.subr.bf16.mxu0 0
        %2762 = vmatpush1.bf16.msra.mxu0 0
        %2763 = vmatprep.mubr.bf16.mxu0 0
        %2764 = vmatmul.mubr.bf16.gmra.mrb[0].mxu0 %v2729
        %v2765 = vpop.f32.mrb[0].mxu0
        %v2766 = vadd.f32 %v2714, %v2765
        %v2767 = vpop.f32.mrb[0].mxu0
        %v2768 = vpop.f32.mrb[0].mxu0
        %v2769 = vpop.f32.mrb[0].mxu0
        %2770 = vdwg.mxu0
        %2771 = vst [vmem:[%s501] sm:$0xff] %v2766
        %s2772 = sand.u32 %s362, 1
        %s2773 = scalar_lea.sflag [#allocation3], %s2772
        %s2774 = sand.u32 %s362, 1
        %s2775 = smul.addr %s2774, 8
        %s2776 = scalar_lea.vmem [#allocation2], %s2775
        // Predicated region
        $region81: #{tpu_custom_call.1} parent=79 // pred_check
          %p2777 = pneg %p372
        $region82: #{tpu_custom_call.1} parent=79 // pred_check_branch
          %2779 = sbr.rel (%p2777) target = $region84
        $region83: #{tpu_custom_call.1} parent=79 // pred_region
          %s2781 = ssub.s32 128, 128
          %2782 = vsyncadd %s2773, %s2781
          %s2783 = smul.addr %s29, 128
          %s2784 = scalar_lea.hbm %s15, %s2783
          %s2786 = sshll.u32 %s2776, 4
          %s2787 = int_to_ptr.vmem [resolvable:$true] %s2786
          %2789 = dma.vmem_to_hbm [thread:$0]  %s2787, 128, %s2784, %s2773
        $region84: #{tpu_custom_call.1} parent=79 // pred_fallthru
          _
      $region80: #{tpu_custom_call.1} parent=5 // pred_fallthru
        _
      %p2790 = scmp.le.s32.totalorder 2, %s24
      // Predicated region
      $region85: #{tpu_custom_call.1} parent=5 // pred_check
        %p2791 = pneg %p2790
      $region86: #{tpu_custom_call.1} parent=5 // pred_check_branch
        %2793 = sbr.rel (%p2791) target = $region88
      $region87: #{tpu_custom_call.1} parent=5 // pred_region
        %s2794 = ssub.s32 %s24, 2
        // Predicated region
        $region89: #{tpu_custom_call.1} parent=87 // pred_check
          %p2795 = pneg %p378
        $region90: #{tpu_custom_call.1} parent=87 // pred_check_branch
          %2797 = sbr.rel (%p2795) target = $region92
        $region91: #{tpu_custom_call.1} parent=87 // pred_region
          %s2798 = sand.u32 %s363, 1
          %s2799 = scalar_lea.sflag [#allocation3], %s2798
          %s2800 = sand.u32 %s363, 1
          %s2801 = smul.addr %s2800, 8
          %s2802 = scalar_lea.vmem [#allocation2], %s2801
          %2803 = dma.done %s2799, 128
        $region92: #{tpu_custom_call.1} parent=87 // pred_fallthru
          _
      $region88: #{tpu_custom_call.1} parent=5 // pred_fallthru
        _
    $region6: #{tpu_custom_call.1} parent=1 // loop_footer
      %s28 = sadd.s32 1, %s24
    $region7: #{tpu_custom_call.1} parent=1 // loop_footer_branch
      %23 = sbr.rel target = $region3
    $region8: #{tpu_custom_call.1} parent=1 // loop_exit
      _
    %2804 = vsyncpa [#allocation3], 1
    %s2805 = scalar_lea.sflag [#allocation3], 1
    %2806 = vsyncpa %s2805, 1

</llo_original>
